<compile_context>
chip_gen: v6e
topology: v6e:2x2x1
jax: 0.10.0
libtpu: 0.0.40
codegen_flags: <defaults>
</compile_context>

<pallas_src>
import jax
import jax.numpy as jnp
from jax.experimental import pallas as pl
from jax.experimental.pallas import tpu as pltpu

NEG_SLOPE = 0.01     # PyTorch LeakyReLU default
ROW_ALIGN = 16       # batch tiles multiple of 16 (bf16 sublane packing)

PARAM_ORDER = ("w1", "b1", "w2", "b2", "w3", "b3", "w4", "b4",
               "pw1", "pb1", "pw2", "pb2", "pw3", "pb3")


def _round_up(n, m):
    return (n + m - 1) // m * m


def _cdiv(a, b):
    return -(-a // b)


def _leaky_relu(x):
    # mul + max on the VPU (one fewer VALU op than compare+select).
    return jnp.maximum(x, NEG_SLOPE * x)


def _layer(h, w_ref, b_ref, *, activate):
    # MXU operands in the weight dtype (bf16); accumulate, bias and activation
    # stay in f32.
    y = jnp.dot(h.astype(w_ref.dtype), w_ref[...],
                preferred_element_type=jnp.float32) + b_ref[...]
    return _leaky_relu(y) if activate else y


def mlp_pred_kernel(
    x_ref,
    w1_ref, b1_ref, w2_ref, b2_ref, w3_ref, b3_ref, w4_ref, b4_ref,   # enc
    pw1_ref, pb1_ref, pw2_ref, pb2_ref, pw3_ref, pb3_ref,             # pred_head
    z_ref, pred_ref,                                                   # outputs
):
    # ---- encoder ----  (x arrives as f32; _layer casts it to bf16 in-kernel)
    h = _layer(x_ref[...], w1_ref, b1_ref, activate=True)
    h = _layer(h, w2_ref, b2_ref, activate=True)
    h = _layer(h, w3_ref, b3_ref, activate=True)
    z = _layer(h, w4_ref, b4_ref, activate=False)              # (tile, P) f32

    # ---- prediction head ----
    # TODO(synk): could fold w4 @ pw1 in f32 (no activation between them) to
    # drop the K=P matmul; kept separate for closer parity with the module.
    q = _layer(z, pw1_ref, pb1_ref, activate=True)
    q = _layer(q, pw2_ref, pb2_ref, activate=True)
    pred = _layer(q, pw3_ref, pb3_ref, activate=False)          # (tile, 1) f32

    z_ref[...] = z
    pred_ref[...] = pred


def prepare_params(params):
    """Cast weights to bf16 / biases to f32 once (hoisted out of the forward)."""
    return tuple(
        params[k].astype(jnp.bfloat16) if "w" in k else params[k].astype(jnp.float32)
        for k in PARAM_ORDER
    )


def mlp_pred_forward(x, weight_args, *, batch_tile=512,
                     vmem_budget_bytes=14 * 1024 * 1024):
    """Fused MLP_pred forward. Returns (z, norm_pred) of shapes (B, P), (B, 1).

    `weight_args` is the tuple returned by prepare_params().
    """
    B, D = x.shape
    H = weight_args[2].shape[0]     # w2: (H, H)
    P = weight_args[6].shape[1]     # w4: (H, P)
    x = x.astype(jnp.float32)       # no-op for f32 input; bf16 cast is in-kernel

    weight_bytes = sum(a.size * a.dtype.itemsize for a in weight_args)

    # Honest per-row VMEM footprint: double-buffered f32 x tile, double-buffered
    # f32 z/pred tiles, plus live f32/bf16 intermediates at width H.
    act_bytes_per_row = 8 * H * 4
    per_row_bytes = 2 * D * 4 + 2 * (P + 1) * 4 + act_bytes_per_row
    # TODO(synk): weights are constant per step; pipeline_mode=pl.Buffered(1)
    # would single-buffer them and halve this term (left default for portability).
    avail = vmem_budget_bytes - 2 * weight_bytes
    max_tile = max(ROW_ALIGN, (avail // per_row_bytes) // ROW_ALIGN * ROW_ALIGN)

    tile = max(ROW_ALIGN, min(batch_tile, max_tile) // ROW_ALIGN * ROW_ALIGN)

    # Keep the grid even and >= 2 steps so dimension_semantics=("parallel",)
    # gives both v7x TensorCores work and the x DMA pipeline overlaps compute.
    n_tiles = max(2, _cdiv(B, tile))
    if n_tiles % 2:
        n_tiles += 1
    tile = _round_up(_cdiv(B, n_tiles), ROW_ALIGN)
    Bp = tile * n_tiles

    if Bp != B:
        x = jnp.pad(x, ((0, Bp - B), (0, 0)))

    def const_spec(arr):
        # Weights/biases: same full block at every grid step (kept resident).
        return pl.BlockSpec(arr.shape, lambda i: (0, 0))

    in_specs = [pl.BlockSpec((tile, D), lambda i: (i, 0))]
    in_specs += [const_spec(a) for a in weight_args]
    out_specs = [pl.BlockSpec((tile, P), lambda i: (i, 0)),
                 pl.BlockSpec((tile, 1), lambda i: (i, 0))]

    flops = 2 * Bp * (D * H + 3 * H * H + 2 * H * P + H)
    bytes_accessed = Bp * D * 4 + weight_bytes + Bp * (P + 1) * 4

    # Give the compiler the same budget the tile-sizing used (16 MiB floor keeps
    # the v5e default; 48 MiB ceiling respects v7x's 64 MiB physical VMEM).
    vmem_limit = int(min(max(vmem_budget_bytes, 16 * 1024 * 1024) + (2 << 20),
                         48 * 1024 * 1024))

    z, pred = pl.pallas_call(
        mlp_pred_kernel,
        out_shape=(jax.ShapeDtypeStruct((Bp, P), jnp.float32),
                   jax.ShapeDtypeStruct((Bp, 1), jnp.float32)),
        grid_spec=pltpu.PrefetchScalarGridSpec(
            num_scalar_prefetch=0,
            grid=(n_tiles,),
            in_specs=in_specs,
            out_specs=out_specs,
        ),
        compiler_params=pltpu.CompilerParams(
            dimension_semantics=("parallel",),      # megacore sharding on v7x
            vmem_limit_bytes=vmem_limit),
        cost_estimate=pl.CostEstimate(
            flops=int(flops), transcendentals=0,
            bytes_accessed=int(bytes_accessed)),
    )(x, *weight_args)

    if Bp != B:
        z, pred = z[:B], pred[:B]
    return z, pred


def init_params(key, n_dim, n_hidden, n_poincare):
    """Deterministic synthetic parameters (shapes match the PyTorch module)."""
    keys = jax.random.split(key, 14)

    def linear(kw, kb, fan_in, fan_out):
        bound = 1.0 / jnp.sqrt(fan_in)
        w = jax.random.uniform(kw, (fan_in, fan_out), jnp.float32, -bound, bound)
        b = jax.random.uniform(kb, (1, fan_out), jnp.float32, -bound, bound)
        return w, b

    p = {}
    p["w1"], p["b1"] = linear(keys[0], keys[1], n_dim, n_hidden)
    p["w2"], p["b2"] = linear(keys[2], keys[3], n_hidden, n_hidden)
    p["w3"], p["b3"] = linear(keys[4], keys[5], n_hidden, n_hidden)
    p["w4"], p["b4"] = linear(keys[6], keys[7], n_hidden, n_poincare)
    p["pw1"], p["pb1"] = linear(keys[8], keys[9], n_poincare, n_hidden)
    p["pw2"], p["pb2"] = linear(keys[10], keys[11], n_hidden, n_hidden)
    p["pw3"], p["pb3"] = linear(keys[12], keys[13], n_hidden, 1)
    return p


def reference_forward(x, p):
    """Pure-JAX reference mirroring the kernel's bf16-operand / f32-accum math."""
    def layer(h, w, b, act):
        y = jnp.dot(h.astype(jnp.bfloat16), w.astype(jnp.bfloat16),
                    preferred_element_type=jnp.float32) + b
        return jnp.maximum(y, NEG_SLOPE * y) if act else y

    h = layer(x, p["w1"], p["b1"], True)
    h = layer(h, p["w2"], p["b2"], True)
    h = layer(h, p["w3"], p["b3"], True)
    z = layer(h, p["w4"], p["b4"], False)
    q = layer(z, p["pw1"], p["pb1"], True)
    q = layer(q, p["pw2"], p["pb2"], True)
    pred = layer(q, p["pw3"], p["pb3"], False)
    return z, pred


if __name__ == "__main__":
    # Small but multi-tile shapes: the tile selection forces an even grid of
    # >= 2 batch tiles (here 2 x 256 rows), so the x DMA pipeline overlaps
    # compute and megacore can shard the grid.
    batch, n_dim, n_hidden, n_poincare = 512, 256, 64, 8

    key = jax.random.PRNGKey(0)
    kx, kp = jax.random.split(key)
    x = jax.random.normal(kx, (batch, n_dim), jnp.float32)
    params = init_params(kp, n_dim, n_hidden, n_poincare)

    weight_args = prepare_params(params)        # cast once, reuse across calls
    z, norm_pred = mlp_pred_forward(x, weight_args)
    jax.block_until_ready((z, norm_pred))

    z_ref, pred_ref = reference_forward(x, params)
    assert z.shape == (batch, n_poincare)
    assert norm_pred.shape == (batch, 1)
    assert jnp.allclose(z, z_ref, atol=2e-3, rtol=2e-3)
    assert jnp.allclose(norm_pred, pred_ref, atol=2e-3, rtol=2e-3)

    print("KERNEL_OK")
</pallas_src>

<mosaic_0001>
module attributes {stable_mosaic.version = 11 : i64} {
  func.func @mlp_pred_kernel(%arg0: i32, %arg1: memref<256x256xf32, #tpu.memory_space<vmem>>, %arg2: memref<256x64xbf16, #tpu.memory_space<vmem>>, %arg3: memref<1x64xf32, #tpu.memory_space<vmem>>, %arg4: memref<64x64xbf16, #tpu.memory_space<vmem>>, %arg5: memref<1x64xf32, #tpu.memory_space<vmem>>, %arg6: memref<64x64xbf16, #tpu.memory_space<vmem>>, %arg7: memref<1x64xf32, #tpu.memory_space<vmem>>, %arg8: memref<64x8xbf16, #tpu.memory_space<vmem>>, %arg9: memref<1x8xf32, #tpu.memory_space<vmem>>, %arg10: memref<8x64xbf16, #tpu.memory_space<vmem>>, %arg11: memref<1x64xf32, #tpu.memory_space<vmem>>, %arg12: memref<64x64xbf16, #tpu.memory_space<vmem>>, %arg13: memref<1x64xf32, #tpu.memory_space<vmem>>, %arg14: memref<64x1xbf16, #tpu.memory_space<vmem>>, %arg15: memref<1x1xf32, #tpu.memory_space<vmem>>, %arg16: memref<256x8xf32, #tpu.memory_space<vmem>>, %arg17: memref<256x1xf32, #tpu.memory_space<vmem>>) attributes {dimension_semantics = [#tpu.dimension_semantics<parallel>], iteration_bounds = array<i64: 2>, scalar_prefetch = 0 : i64, scratch_operands = 0 : i64, tpu.core_type = #tpu.core_type<tc>, window_params = [{transform_indices = @transform_0, window_bounds = array<i64: 256, 256>}, {pipeline_mode = #tpu.pipeline_mode<synchronous>, transform_indices = @transform_1, window_bounds = array<i64: 256, 64>}, {pipeline_mode = #tpu.pipeline_mode<synchronous>, transform_indices = @transform_2, window_bounds = array<i64: 1, 64>}, {pipeline_mode = #tpu.pipeline_mode<synchronous>, transform_indices = @transform_3, window_bounds = array<i64: 64, 64>}, {pipeline_mode = #tpu.pipeline_mode<synchronous>, transform_indices = @transform_4, window_bounds = array<i64: 1, 64>}, {pipeline_mode = #tpu.pipeline_mode<synchronous>, transform_indices = @transform_5, window_bounds = array<i64: 64, 64>}, {pipeline_mode = #tpu.pipeline_mode<synchronous>, transform_indices = @transform_6, window_bounds = array<i64: 1, 64>}, {pipeline_mode = #tpu.pipeline_mode<synchronous>, transform_indices = @transform_7, window_bounds = array<i64: 64, 8>}, {pipeline_mode = #tpu.pipeline_mode<synchronous>, transform_indices = @transform_8, window_bounds = array<i64: 1, 8>}, {pipeline_mode = #tpu.pipeline_mode<synchronous>, transform_indices = @transform_9, window_bounds = array<i64: 8, 64>}, {pipeline_mode = #tpu.pipeline_mode<synchronous>, transform_indices = @transform_10, window_bounds = array<i64: 1, 64>}, {pipeline_mode = #tpu.pipeline_mode<synchronous>, transform_indices = @transform_11, window_bounds = array<i64: 64, 64>}, {pipeline_mode = #tpu.pipeline_mode<synchronous>, transform_indices = @transform_12, window_bounds = array<i64: 1, 64>}, {pipeline_mode = #tpu.pipeline_mode<synchronous>, transform_indices = @transform_13, window_bounds = array<i64: 64, 1>}, {pipeline_mode = #tpu.pipeline_mode<synchronous>, transform_indices = @transform_14, window_bounds = array<i64: 1, 1>}, {transform_indices = @transform_15, window_bounds = array<i64: 256, 8>}, {transform_indices = @transform_16, window_bounds = array<i64: 256, 1>}]} {
    %c0 = arith.constant 0 : index
    %c0_0 = arith.constant 0 : index
    %0 = vector.load %arg1[%c0, %c0_0] : memref<256x256xf32, #tpu.memory_space<vmem>>, vector<256x256xf32>
    %1 = arith.truncf %0 : vector<256x256xf32> to vector<256x256xbf16>
    %c0_1 = arith.constant 0 : index
    %c0_2 = arith.constant 0 : index
    %2 = vector.load %arg2[%c0_1, %c0_2] : memref<256x64xbf16, #tpu.memory_space<vmem>>, vector<256x64xbf16>
    %cst = arith.constant dense<0.000000e+00> : vector<256x64xf32>
    %3 = tpu.matmul %1, %2, %cst {dimension_numbers = #tpu.dot_dimension_numbers<[1], [0], [0], [1], [0, 0, 1, 1], [], []>} : vector<256x256xbf16>, vector<256x64xbf16>, vector<256x64xf32> -> vector<256x64xf32>
    %c0_3 = arith.constant 0 : index
    %c0_4 = arith.constant 0 : index
    %4 = vector.load %arg3[%c0_3, %c0_4] : memref<1x64xf32, #tpu.memory_space<vmem>>, vector<1x64xf32>
    %5 = vector.broadcast %4 : vector<1x64xf32> to vector<256x64xf32>
    %6 = arith.addf %3, %5 : vector<256x64xf32>
    %cst_5 = arith.constant 0.00999999977 : f32
    %7 = vector.broadcast %cst_5 : f32 to vector<256x64xf32>
    %8 = arith.mulf %7, %6 : vector<256x64xf32>
    %9 = arith.maximumf %6, %8 : vector<256x64xf32>
    %10 = arith.truncf %9 : vector<256x64xf32> to vector<256x64xbf16>
    %c0_6 = arith.constant 0 : index
    %c0_7 = arith.constant 0 : index
    %11 = vector.load %arg4[%c0_6, %c0_7] : memref<64x64xbf16, #tpu.memory_space<vmem>>, vector<64x64xbf16>
    %cst_8 = arith.constant dense<0.000000e+00> : vector<256x64xf32>
    %12 = tpu.matmul %10, %11, %cst_8 {dimension_numbers = #tpu.dot_dimension_numbers<[1], [0], [0], [1], [0, 0, 1, 1], [], []>} : vector<256x64xbf16>, vector<64x64xbf16>, vector<256x64xf32> -> vector<256x64xf32>
    %c0_9 = arith.constant 0 : index
    %c0_10 = arith.constant 0 : index
    %13 = vector.load %arg5[%c0_9, %c0_10] : memref<1x64xf32, #tpu.memory_space<vmem>>, vector<1x64xf32>
    %14 = vector.broadcast %13 : vector<1x64xf32> to vector<256x64xf32>
    %15 = arith.addf %12, %14 : vector<256x64xf32>
    %cst_11 = arith.constant 0.00999999977 : f32
    %16 = vector.broadcast %cst_11 : f32 to vector<256x64xf32>
    %17 = arith.mulf %16, %15 : vector<256x64xf32>
    %18 = arith.maximumf %15, %17 : vector<256x64xf32>
    %19 = arith.truncf %18 : vector<256x64xf32> to vector<256x64xbf16>
    %c0_12 = arith.constant 0 : index
    %c0_13 = arith.constant 0 : index
    %20 = vector.load %arg6[%c0_12, %c0_13] : memref<64x64xbf16, #tpu.memory_space<vmem>>, vector<64x64xbf16>
    %cst_14 = arith.constant dense<0.000000e+00> : vector<256x64xf32>
    %21 = tpu.matmul %19, %20, %cst_14 {dimension_numbers = #tpu.dot_dimension_numbers<[1], [0], [0], [1], [0, 0, 1, 1], [], []>} : vector<256x64xbf16>, vector<64x64xbf16>, vector<256x64xf32> -> vector<256x64xf32>
    %c0_15 = arith.constant 0 : index
    %c0_16 = arith.constant 0 : index
    %22 = vector.load %arg7[%c0_15, %c0_16] : memref<1x64xf32, #tpu.memory_space<vmem>>, vector<1x64xf32>
    %23 = vector.broadcast %22 : vector<1x64xf32> to vector<256x64xf32>
    %24 = arith.addf %21, %23 : vector<256x64xf32>
    %cst_17 = arith.constant 0.00999999977 : f32
    %25 = vector.broadcast %cst_17 : f32 to vector<256x64xf32>
    %26 = arith.mulf %25, %24 : vector<256x64xf32>
    %27 = arith.maximumf %24, %26 : vector<256x64xf32>
    %28 = arith.truncf %27 : vector<256x64xf32> to vector<256x64xbf16>
    %c0_18 = arith.constant 0 : index
    %c0_19 = arith.constant 0 : index
    %29 = vector.load %arg8[%c0_18, %c0_19] : memref<64x8xbf16, #tpu.memory_space<vmem>>, vector<64x8xbf16>
    %cst_20 = arith.constant dense<0.000000e+00> : vector<256x8xf32>
    %30 = tpu.matmul %28, %29, %cst_20 {dimension_numbers = #tpu.dot_dimension_numbers<[1], [0], [0], [1], [0, 0, 1, 1], [], []>} : vector<256x64xbf16>, vector<64x8xbf16>, vector<256x8xf32> -> vector<256x8xf32>
    %c0_21 = arith.constant 0 : index
    %c0_22 = arith.constant 0 : index
    %31 = vector.load %arg9[%c0_21, %c0_22] : memref<1x8xf32, #tpu.memory_space<vmem>>, vector<1x8xf32>
    %32 = vector.broadcast %31 : vector<1x8xf32> to vector<256x8xf32>
    %33 = arith.addf %30, %32 : vector<256x8xf32>
    %34 = arith.truncf %33 : vector<256x8xf32> to vector<256x8xbf16>
    %c0_23 = arith.constant 0 : index
    %c0_24 = arith.constant 0 : index
    %35 = vector.load %arg10[%c0_23, %c0_24] : memref<8x64xbf16, #tpu.memory_space<vmem>>, vector<8x64xbf16>
    %cst_25 = arith.constant dense<0.000000e+00> : vector<256x64xf32>
    %36 = tpu.matmul %34, %35, %cst_25 {dimension_numbers = #tpu.dot_dimension_numbers<[1], [0], [0], [1], [0, 0, 1, 1], [], []>} : vector<256x8xbf16>, vector<8x64xbf16>, vector<256x64xf32> -> vector<256x64xf32>
    %c0_26 = arith.constant 0 : index
    %c0_27 = arith.constant 0 : index
    %37 = vector.load %arg11[%c0_26, %c0_27] : memref<1x64xf32, #tpu.memory_space<vmem>>, vector<1x64xf32>
    %38 = vector.broadcast %37 : vector<1x64xf32> to vector<256x64xf32>
    %39 = arith.addf %36, %38 : vector<256x64xf32>
    %cst_28 = arith.constant 0.00999999977 : f32
    %40 = vector.broadcast %cst_28 : f32 to vector<256x64xf32>
    %41 = arith.mulf %40, %39 : vector<256x64xf32>
    %42 = arith.maximumf %39, %41 : vector<256x64xf32>
    %43 = arith.truncf %42 : vector<256x64xf32> to vector<256x64xbf16>
    %c0_29 = arith.constant 0 : index
    %c0_30 = arith.constant 0 : index
    %44 = vector.load %arg12[%c0_29, %c0_30] : memref<64x64xbf16, #tpu.memory_space<vmem>>, vector<64x64xbf16>
    %cst_31 = arith.constant dense<0.000000e+00> : vector<256x64xf32>
    %45 = tpu.matmul %43, %44, %cst_31 {dimension_numbers = #tpu.dot_dimension_numbers<[1], [0], [0], [1], [0, 0, 1, 1], [], []>} : vector<256x64xbf16>, vector<64x64xbf16>, vector<256x64xf32> -> vector<256x64xf32>
    %c0_32 = arith.constant 0 : index
    %c0_33 = arith.constant 0 : index
    %46 = vector.load %arg13[%c0_32, %c0_33] : memref<1x64xf32, #tpu.memory_space<vmem>>, vector<1x64xf32>
    %47 = vector.broadcast %46 : vector<1x64xf32> to vector<256x64xf32>
    %48 = arith.addf %45, %47 : vector<256x64xf32>
    %cst_34 = arith.constant 0.00999999977 : f32
    %49 = vector.broadcast %cst_34 : f32 to vector<256x64xf32>
    %50 = arith.mulf %49, %48 : vector<256x64xf32>
    %51 = arith.maximumf %48, %50 : vector<256x64xf32>
    %52 = arith.truncf %51 : vector<256x64xf32> to vector<256x64xbf16>
    %c0_35 = arith.constant 0 : index
    %c0_36 = arith.constant 0 : index
    %53 = vector.load %arg14[%c0_35, %c0_36] : memref<64x1xbf16, #tpu.memory_space<vmem>>, vector<64x1xbf16>
    %cst_37 = arith.constant dense<0.000000e+00> : vector<256x1xf32>
    %54 = tpu.matmul %52, %53, %cst_37 {dimension_numbers = #tpu.dot_dimension_numbers<[1], [0], [0], [1], [0, 0, 1, 1], [], []>} : vector<256x64xbf16>, vector<64x1xbf16>, vector<256x1xf32> -> vector<256x1xf32>
    %c0_38 = arith.constant 0 : index
    %c0_39 = arith.constant 0 : index
    %55 = vector.load %arg15[%c0_38, %c0_39] : memref<1x1xf32, #tpu.memory_space<vmem>>, vector<1x1xf32>
    %56 = vector.broadcast %55 : vector<1x1xf32> to vector<256x1xf32>
    %57 = arith.addf %54, %56 : vector<256x1xf32>
    %c0_40 = arith.constant 0 : index
    %c0_41 = arith.constant 0 : index
    %58 = vector.load %arg16[%c0_40, %c0_41] : memref<256x8xf32, #tpu.memory_space<vmem>>, vector<256x8xf32>
    tpu.vector_store %arg16[%c0_40, %c0_41], %33 {strides = array<i32>} : memref<256x8xf32, #tpu.memory_space<vmem>>, vector<256x8xf32>,
    %c0_42 = arith.constant 0 : index
    %c0_43 = arith.constant 0 : index
    %59 = vector.load %arg17[%c0_42, %c0_43] : memref<256x1xf32, #tpu.memory_space<vmem>>, vector<256x1xf32>
    tpu.vector_store %arg17[%c0_42, %c0_43], %57 {strides = array<i32>} : memref<256x1xf32, #tpu.memory_space<vmem>>, vector<256x1xf32>,
    return
  }
  func.func @transform_0(%arg0: i32) -> (i32, i32) {
    %c0_i32 = arith.constant 0 : i32
    %c0_i32_0 = arith.constant 0 : i32
    return %arg0, %c0_i32 : i32, i32
  }
  func.func @transform_1(%arg0: i32) -> (i32, i32) {
    %c0_i32 = arith.constant 0 : i32
    %c0_i32_0 = arith.constant 0 : i32
    %c0_i32_1 = arith.constant 0 : i32
    return %c0_i32, %c0_i32_0 : i32, i32
  }
  func.func @transform_2(%arg0: i32) -> (i32, i32) {
    %c0_i32 = arith.constant 0 : i32
    %c0_i32_0 = arith.constant 0 : i32
    %c0_i32_1 = arith.constant 0 : i32
    return %c0_i32, %c0_i32_0 : i32, i32
  }
  func.func @transform_3(%arg0: i32) -> (i32, i32) {
    %c0_i32 = arith.constant 0 : i32
    %c0_i32_0 = arith.constant 0 : i32
    %c0_i32_1 = arith.constant 0 : i32
    return %c0_i32, %c0_i32_0 : i32, i32
  }
  func.func @transform_4(%arg0: i32) -> (i32, i32) {
    %c0_i32 = arith.constant 0 : i32
    %c0_i32_0 = arith.constant 0 : i32
    %c0_i32_1 = arith.constant 0 : i32
    return %c0_i32, %c0_i32_0 : i32, i32
  }
  func.func @transform_5(%arg0: i32) -> (i32, i32) {
    %c0_i32 = arith.constant 0 : i32
    %c0_i32_0 = arith.constant 0 : i32
    %c0_i32_1 = arith.constant 0 : i32
    return %c0_i32, %c0_i32_0 : i32, i32
  }
  func.func @transform_6(%arg0: i32) -> (i32, i32) {
    %c0_i32 = arith.constant 0 : i32
    %c0_i32_0 = arith.constant 0 : i32
    %c0_i32_1 = arith.constant 0 : i32
    return %c0_i32, %c0_i32_0 : i32, i32
  }
  func.func @transform_7(%arg0: i32) -> (i32, i32) {
    %c0_i32 = arith.constant 0 : i32
    %c0_i32_0 = arith.constant 0 : i32
    %c0_i32_1 = arith.constant 0 : i32
    return %c0_i32, %c0_i32_0 : i32, i32
  }
  func.func @transform_8(%arg0: i32) -> (i32, i32) {
    %c0_i32 = arith.constant 0 : i32
    %c0_i32_0 = arith.constant 0 : i32
    %c0_i32_1 = arith.constant 0 : i32
    return %c0_i32, %c0_i32_0 : i32, i32
  }
  func.func @transform_9(%arg0: i32) -> (i32, i32) {
    %c0_i32 = arith.constant 0 : i32
    %c0_i32_0 = arith.constant 0 : i32
    %c0_i32_1 = arith.constant 0 : i32
    return %c0_i32, %c0_i32_0 : i32, i32
  }
  func.func @transform_10(%arg0: i32) -> (i32, i32) {
    %c0_i32 = arith.constant 0 : i32
    %c0_i32_0 = arith.constant 0 : i32
    %c0_i32_1 = arith.constant 0 : i32
    return %c0_i32, %c0_i32_0 : i32, i32
  }
  func.func @transform_11(%arg0: i32) -> (i32, i32) {
    %c0_i32 = arith.constant 0 : i32
    %c0_i32_0 = arith.constant 0 : i32
    %c0_i32_1 = arith.constant 0 : i32
    return %c0_i32, %c0_i32_0 : i32, i32
  }
  func.func @transform_12(%arg0: i32) -> (i32, i32) {
    %c0_i32 = arith.constant 0 : i32
    %c0_i32_0 = arith.constant 0 : i32
    %c0_i32_1 = arith.constant 0 : i32
    return %c0_i32, %c0_i32_0 : i32, i32
  }
  func.func @transform_13(%arg0: i32) -> (i32, i32) {
    %c0_i32 = arith.constant 0 : i32
    %c0_i32_0 = arith.constant 0 : i32
    %c0_i32_1 = arith.constant 0 : i32
    return %c0_i32, %c0_i32_0 : i32, i32
  }
  func.func @transform_14(%arg0: i32) -> (i32, i32) {
    %c0_i32 = arith.constant 0 : i32
    %c0_i32_0 = arith.constant 0 : i32
    %c0_i32_1 = arith.constant 0 : i32
    return %c0_i32, %c0_i32_0 : i32, i32
  }
  func.func @transform_15(%arg0: i32) -> (i32, i32) {
    %c0_i32 = arith.constant 0 : i32
    %c0_i32_0 = arith.constant 0 : i32
    return %arg0, %c0_i32 : i32, i32
  }
  func.func @transform_16(%arg0: i32) -> (i32, i32) {
    %c0_i32 = arith.constant 0 : i32
    %c0_i32_0 = arith.constant 0 : i32
    return %arg0, %c0_i32 : i32, i32
  }
}

</mosaic_0001>

<llo_original>
// kernel: tpu_custom_call.1
$region0: #{tpu_custom_call.1}
  #allocation0 [shape = 'u32[]', space=smem, size = 0x4, offset = 0x4, fixed_abs, tag = 'smem constant byte address 0x4 - core index']
  #allocation1 [shape = 'u32[144,128]{1,0:T(1,128)}', space=vmem, size = 0x12000, scoped, tag = 'internal scratch']
  #allocation2 [shape = 'f32[1,1]{1,0:T(1,128)S(1)}', space=vmem, size = 0x200, scoped, tag = 'scoped memory for tpu_custom_call.1']
  %s0 = inlined_call_operand.hbm [shape: f32[512,256], index: 0, kind: input, shape index: {}]
  %s1 = inlined_call_operand.vmem [shape: bf16[256,64], index: 1, kind: input, shape index: {}]
  %s2 = inlined_call_operand.vmem [shape: f32[1,64], index: 2, kind: input, shape index: {}]
  %s3 = inlined_call_operand.vmem [shape: bf16[64,64], index: 3, kind: input, shape index: {}]
  %s4 = inlined_call_operand.vmem [shape: f32[1,64], index: 4, kind: input, shape index: {}]
  %s5 = inlined_call_operand.vmem [shape: bf16[64,64], index: 5, kind: input, shape index: {}]
  %s6 = inlined_call_operand.vmem [shape: f32[1,64], index: 6, kind: input, shape index: {}]
  %s7 = inlined_call_operand.vmem [shape: bf16[64,8], index: 7, kind: input, shape index: {}]
  %s8 = inlined_call_operand.vmem [shape: f32[1,8], index: 8, kind: input, shape index: {}]
  %s9 = inlined_call_operand.vmem [shape: bf16[8,64], index: 9, kind: input, shape index: {}]
  %s10 = inlined_call_operand.vmem [shape: f32[1,64], index: 10, kind: input, shape index: {}]
  %s11 = inlined_call_operand.vmem [shape: bf16[64,64], index: 11, kind: input, shape index: {}]
  %s12 = inlined_call_operand.vmem [shape: f32[1,64], index: 12, kind: input, shape index: {}]
  %s13 = inlined_call_operand.vmem [shape: bf16[64,1], index: 13, kind: input, shape index: {}]
  %s14 = inlined_call_operand.<no memory space> [shape: f32[1,1], index: 14, kind: input, shape index: {}]
  %s15 = inlined_call_operand.vmem [shape: f32[512,8], index: 15, kind: output, shape index: {0}]
  %s16 = inlined_call_operand.vmem [shape: f32[512,1], index: 16, kind: output, shape index: {1}]
  %17 = xla_tuple %s15, %s16
  %s18 = sld [smem:[#allocation0]]
  $region105: #{tpu_custom_call.1} parent=0
    _
  %s20 = ssub.s32 1, %s18
  %s21 = scalar_select 0, %s20, %s18
  %v22 = vstv %s14
  %23 = vst [vmem:[#allocation2] sm:$0x1] %v22
  $region1: #{tpu_custom_call.1} parent=0
    #allocation3 [shape = 'u8[524288]{0}', space=vmem, size = 0x80000, scoped, tag = 'input window, operand 0']
    #allocation4 [shape = 's32[2]{0}', space=sflag, size = 0x8, scoped, tag = 'scoped memory for tpu_custom_call.1']
    %24 = vsyncpa [#allocation4], 0
    %s25 = scalar_lea.sflag [#allocation4], 1
    %26 = vsyncpa %s25, 0
    loop: start=0, step=1, limit=4
    $region2: #{tpu_custom_call.1} parent=1 // loop_pre_header
      _
    $region3: #{tpu_custom_call.1} parent=1 // loop_header
      %s28 = sphi 0, %s32
      %p29 = scmp.ge.s32.totalorder %s28, 4
      %s38 = sphi 0, %s40
      %s41 = sphi 0, %s38
      %s42 = sphi 0, %s41
      %s58 = sphi 0, %s42
      %s62 = sphi 0, %s62
      %s64 = sphi 0, %s62
      %s65 = sphi 0, %s64
      %s79 = sphi 0, %s65
      %s83 = sphi 0, %s83
      %s85 = sphi 0, %s83
      %s86 = sphi 0, %s85
      %s100 = sphi 0, %s86
      %s104 = sphi 0, %s104
      %s106 = sphi 0, %s104
      %s107 = sphi 0, %s106
      %s121 = sphi 0, %s107
      %s125 = sphi 0, %s125
      %s127 = sphi 0, %s125
      %s128 = sphi 0, %s127
      %s142 = sphi 0, %s128
      %s146 = sphi 0, %s146
      %s148 = sphi 0, %s146
      %s149 = sphi 0, %s148
      %s163 = sphi 0, %s149
      %s167 = sphi 0, %s167
      %s169 = sphi 0, %s167
      %s170 = sphi 0, %s169
      %s184 = sphi 0, %s170
      %s188 = sphi 0, %s188
      %s190 = sphi 0, %s188
      %s191 = sphi 0, %s190
      %s205 = sphi 0, %s191
      %s209 = sphi 0, %s209
      %s211 = sphi 0, %s209
      %s212 = sphi 0, %s211
      %s226 = sphi 0, %s212
      %s230 = sphi 0, %s230
      %s232 = sphi 0, %s230
      %s233 = sphi 0, %s232
      %s247 = sphi 0, %s233
      %s251 = sphi 0, %s251
      %s253 = sphi 0, %s251
      %s254 = sphi 0, %s253
      %s268 = sphi 0, %s254
      %s272 = sphi 0, %s272
      %s274 = sphi 0, %s272
      %s275 = sphi 0, %s274
      %s289 = sphi 0, %s275
      %s293 = sphi 0, %s293
      %s295 = sphi 0, %s293
      %s296 = sphi 0, %s295
      %s310 = sphi 0, %s296
      %s314 = sphi 0, %s314
      %s316 = sphi 0, %s314
      %s317 = sphi 0, %s316
      %s331 = sphi 0, %s317
      %s335 = sphi 0, %s335
      %s337 = sphi 0, %s335
      %s338 = sphi 0, %s337
      %s352 = sphi 0, %s338
      %s358 = sphi 0, %s360
      %s361 = sphi 0, %s358
      %s362 = sphi 0, %s361
      %s378 = sphi 0, %s362
      %s384 = sphi 0, %s386
      %s387 = sphi 0, %s384
      %s388 = sphi 0, %s387
      %s404 = sphi 0, %s388
    $region4: #{tpu_custom_call.1} parent=1 // loop_header_branch
      %31 = sbr.rel (%p29) target = $region8
    $region5: #{tpu_custom_call.1} parent=1 // loop_body
      %s33 = ssub.s32 %s28, 1
      %s34 = ssub.s32 %s28, 2
      %s35 = sadd.s32 %s28, 1
      %s36 = ssub.s32 %s28, %s35
      %p37 = scmp.eq.s32.totalorder %s36, 0
      %s39 = sadd.s32 %s38, 1
      %s40 = scalar_select %p37, %s38, %s39
      %p43 = pneg %p37
      %p44 = scmp.eq.s32.totalorder %s28, 1
      %p45 = por %p43, %p44
      %p46 = scmp.ne.s32.totalorder %s38, %s41
      %p47 = scmp.eq.s32.totalorder %s28, 0
      %p48 = por %p46, %p47
      %p49 = scmp.ne.s32.totalorder %s38, %s41
      %p50 = scmp.eq.s32.totalorder %s33, 1
      %p51 = por %p49, %p50
      %p52 = scmp.ne.s32.totalorder %s41, %s42
      %p53 = scmp.eq.s32.totalorder %s33, 0
      %p54 = por %p52, %p53
      %p55 = scmp.ne.s32.totalorder %s41, %s42
      %p56 = scmp.eq.s32.totalorder %s34, 1
      %p57 = por %p55, %p56
      %p59 = scmp.ne.s32.totalorder %s42, %s58
      %p60 = scmp.eq.s32.totalorder %s34, 0
      %p61 = por %p59, %p60
      %s63 = sadd.s32 %s62, 1
      %p66 = scmp.eq.s32.totalorder %s28, 1
      %p67 = scmp.ne.s32.totalorder %s62, %s64
      %p68 = scmp.eq.s32.totalorder %s28, 0
      %p69 = por %p67, %p68
      %p70 = scmp.ne.s32.totalorder %s62, %s64
      %p71 = scmp.eq.s32.totalorder %s33, 1
      %p72 = por %p70, %p71
      %p73 = scmp.ne.s32.totalorder %s64, %s65
      %p74 = scmp.eq.s32.totalorder %s33, 0
      %p75 = por %p73, %p74
      %p76 = scmp.ne.s32.totalorder %s64, %s65
      %p77 = scmp.eq.s32.totalorder %s34, 1
      %p78 = por %p76, %p77
      %p80 = scmp.ne.s32.totalorder %s65, %s79
      %p81 = scmp.eq.s32.totalorder %s34, 0
      %p82 = por %p80, %p81
      %s84 = sadd.s32 %s83, 1
      %p87 = scmp.eq.s32.totalorder %s28, 1
      %p88 = scmp.ne.s32.totalorder %s83, %s85
      %p89 = scmp.eq.s32.totalorder %s28, 0
      %p90 = por %p88, %p89
      %p91 = scmp.ne.s32.totalorder %s83, %s85
      %p92 = scmp.eq.s32.totalorder %s33, 1
      %p93 = por %p91, %p92
      %p94 = scmp.ne.s32.totalorder %s85, %s86
      %p95 = scmp.eq.s32.totalorder %s33, 0
      %p96 = por %p94, %p95
      %p97 = scmp.ne.s32.totalorder %s85, %s86
      %p98 = scmp.eq.s32.totalorder %s34, 1
      %p99 = por %p97, %p98
      %p101 = scmp.ne.s32.totalorder %s86, %s100
      %p102 = scmp.eq.s32.totalorder %s34, 0
      %p103 = por %p101, %p102
      %s105 = sadd.s32 %s104, 1
      %p108 = scmp.eq.s32.totalorder %s28, 1
      %p109 = scmp.ne.s32.totalorder %s104, %s106
      %p110 = scmp.eq.s32.totalorder %s28, 0
      %p111 = por %p109, %p110
      %p112 = scmp.ne.s32.totalorder %s104, %s106
      %p113 = scmp.eq.s32.totalorder %s33, 1
      %p114 = por %p112, %p113
      %p115 = scmp.ne.s32.totalorder %s106, %s107
      %p116 = scmp.eq.s32.totalorder %s33, 0
      %p117 = por %p115, %p116
      %p118 = scmp.ne.s32.totalorder %s106, %s107
      %p119 = scmp.eq.s32.totalorder %s34, 1
      %p120 = por %p118, %p119
      %p122 = scmp.ne.s32.totalorder %s107, %s121
      %p123 = scmp.eq.s32.totalorder %s34, 0
      %p124 = por %p122, %p123
      %s126 = sadd.s32 %s125, 1
      %p129 = scmp.eq.s32.totalorder %s28, 1
      %p130 = scmp.ne.s32.totalorder %s125, %s127
      %p131 = scmp.eq.s32.totalorder %s28, 0
      %p132 = por %p130, %p131
      %p133 = scmp.ne.s32.totalorder %s125, %s127
      %p134 = scmp.eq.s32.totalorder %s33, 1
      %p135 = por %p133, %p134
      %p136 = scmp.ne.s32.totalorder %s127, %s128
      %p137 = scmp.eq.s32.totalorder %s33, 0
      %p138 = por %p136, %p137
      %p139 = scmp.ne.s32.totalorder %s127, %s128
      %p140 = scmp.eq.s32.totalorder %s34, 1
      %p141 = por %p139, %p140
      %p143 = scmp.ne.s32.totalorder %s128, %s142
      %p144 = scmp.eq.s32.totalorder %s34, 0
      %p145 = por %p143, %p144
      %s147 = sadd.s32 %s146, 1
      %p150 = scmp.eq.s32.totalorder %s28, 1
      %p151 = scmp.ne.s32.totalorder %s146, %s148
      %p152 = scmp.eq.s32.totalorder %s28, 0
      %p153 = por %p151, %p152
      %p154 = scmp.ne.s32.totalorder %s146, %s148
      %p155 = scmp.eq.s32.totalorder %s33, 1
      %p156 = por %p154, %p155
      %p157 = scmp.ne.s32.totalorder %s148, %s149
      %p158 = scmp.eq.s32.totalorder %s33, 0
      %p159 = por %p157, %p158
      %p160 = scmp.ne.s32.totalorder %s148, %s149
      %p161 = scmp.eq.s32.totalorder %s34, 1
      %p162 = por %p160, %p161
      %p164 = scmp.ne.s32.totalorder %s149, %s163
      %p165 = scmp.eq.s32.totalorder %s34, 0
      %p166 = por %p164, %p165
      %s168 = sadd.s32 %s167, 1
      %p171 = scmp.eq.s32.totalorder %s28, 1
      %p172 = scmp.ne.s32.totalorder %s167, %s169
      %p173 = scmp.eq.s32.totalorder %s28, 0
      %p174 = por %p172, %p173
      %p175 = scmp.ne.s32.totalorder %s167, %s169
      %p176 = scmp.eq.s32.totalorder %s33, 1
      %p177 = por %p175, %p176
      %p178 = scmp.ne.s32.totalorder %s169, %s170
      %p179 = scmp.eq.s32.totalorder %s33, 0
      %p180 = por %p178, %p179
      %p181 = scmp.ne.s32.totalorder %s169, %s170
      %p182 = scmp.eq.s32.totalorder %s34, 1
      %p183 = por %p181, %p182
      %p185 = scmp.ne.s32.totalorder %s170, %s184
      %p186 = scmp.eq.s32.totalorder %s34, 0
      %p187 = por %p185, %p186
      %s189 = sadd.s32 %s188, 1
      %p192 = scmp.eq.s32.totalorder %s28, 1
      %p193 = scmp.ne.s32.totalorder %s188, %s190
      %p194 = scmp.eq.s32.totalorder %s28, 0
      %p195 = por %p193, %p194
      %p196 = scmp.ne.s32.totalorder %s188, %s190
      %p197 = scmp.eq.s32.totalorder %s33, 1
      %p198 = por %p196, %p197
      %p199 = scmp.ne.s32.totalorder %s190, %s191
      %p200 = scmp.eq.s32.totalorder %s33, 0
      %p201 = por %p199, %p200
      %p202 = scmp.ne.s32.totalorder %s190, %s191
      %p203 = scmp.eq.s32.totalorder %s34, 1
      %p204 = por %p202, %p203
      %p206 = scmp.ne.s32.totalorder %s191, %s205
      %p207 = scmp.eq.s32.totalorder %s34, 0
      %p208 = por %p206, %p207
      %s210 = sadd.s32 %s209, 1
      %p213 = scmp.eq.s32.totalorder %s28, 1
      %p214 = scmp.ne.s32.totalorder %s209, %s211
      %p215 = scmp.eq.s32.totalorder %s28, 0
      %p216 = por %p214, %p215
      %p217 = scmp.ne.s32.totalorder %s209, %s211
      %p218 = scmp.eq.s32.totalorder %s33, 1
      %p219 = por %p217, %p218
      %p220 = scmp.ne.s32.totalorder %s211, %s212
      %p221 = scmp.eq.s32.totalorder %s33, 0
      %p222 = por %p220, %p221
      %p223 = scmp.ne.s32.totalorder %s211, %s212
      %p224 = scmp.eq.s32.totalorder %s34, 1
      %p225 = por %p223, %p224
      %p227 = scmp.ne.s32.totalorder %s212, %s226
      %p228 = scmp.eq.s32.totalorder %s34, 0
      %p229 = por %p227, %p228
      %s231 = sadd.s32 %s230, 1
      %p234 = scmp.eq.s32.totalorder %s28, 1
      %p235 = scmp.ne.s32.totalorder %s230, %s232
      %p236 = scmp.eq.s32.totalorder %s28, 0
      %p237 = por %p235, %p236
      %p238 = scmp.ne.s32.totalorder %s230, %s232
      %p239 = scmp.eq.s32.totalorder %s33, 1
      %p240 = por %p238, %p239
      %p241 = scmp.ne.s32.totalorder %s232, %s233
      %p242 = scmp.eq.s32.totalorder %s33, 0
      %p243 = por %p241, %p242
      %p244 = scmp.ne.s32.totalorder %s232, %s233
      %p245 = scmp.eq.s32.totalorder %s34, 1
      %p246 = por %p244, %p245
      %p248 = scmp.ne.s32.totalorder %s233, %s247
      %p249 = scmp.eq.s32.totalorder %s34, 0
      %p250 = por %p248, %p249
      %s252 = sadd.s32 %s251, 1
      %p255 = scmp.eq.s32.totalorder %s28, 1
      %p256 = scmp.ne.s32.totalorder %s251, %s253
      %p257 = scmp.eq.s32.totalorder %s28, 0
      %p258 = por %p256, %p257
      %p259 = scmp.ne.s32.totalorder %s251, %s253
      %p260 = scmp.eq.s32.totalorder %s33, 1
      %p261 = por %p259, %p260
      %p262 = scmp.ne.s32.totalorder %s253, %s254
      %p263 = scmp.eq.s32.totalorder %s33, 0
      %p264 = por %p262, %p263
      %p265 = scmp.ne.s32.totalorder %s253, %s254
      %p266 = scmp.eq.s32.totalorder %s34, 1
      %p267 = por %p265, %p266
      %p269 = scmp.ne.s32.totalorder %s254, %s268
      %p270 = scmp.eq.s32.totalorder %s34, 0
      %p271 = por %p269, %p270
      %s273 = sadd.s32 %s272, 1
      %p276 = scmp.eq.s32.totalorder %s28, 1
      %p277 = scmp.ne.s32.totalorder %s272, %s274
      %p278 = scmp.eq.s32.totalorder %s28, 0
      %p279 = por %p277, %p278
      %p280 = scmp.ne.s32.totalorder %s272, %s274
      %p281 = scmp.eq.s32.totalorder %s33, 1
      %p282 = por %p280, %p281
      %p283 = scmp.ne.s32.totalorder %s274, %s275
      %p284 = scmp.eq.s32.totalorder %s33, 0
      %p285 = por %p283, %p284
      %p286 = scmp.ne.s32.totalorder %s274, %s275
      %p287 = scmp.eq.s32.totalorder %s34, 1
      %p288 = por %p286, %p287
      %p290 = scmp.ne.s32.totalorder %s275, %s289
      %p291 = scmp.eq.s32.totalorder %s34, 0
      %p292 = por %p290, %p291
      %s294 = sadd.s32 %s293, 1
      %p297 = scmp.eq.s32.totalorder %s28, 1
      %p298 = scmp.ne.s32.totalorder %s293, %s295
      %p299 = scmp.eq.s32.totalorder %s28, 0
      %p300 = por %p298, %p299
      %p301 = scmp.ne.s32.totalorder %s293, %s295
      %p302 = scmp.eq.s32.totalorder %s33, 1
      %p303 = por %p301, %p302
      %p304 = scmp.ne.s32.totalorder %s295, %s296
      %p305 = scmp.eq.s32.totalorder %s33, 0
      %p306 = por %p304, %p305
      %p307 = scmp.ne.s32.totalorder %s295, %s296
      %p308 = scmp.eq.s32.totalorder %s34, 1
      %p309 = por %p307, %p308
      %p311 = scmp.ne.s32.totalorder %s296, %s310
      %p312 = scmp.eq.s32.totalorder %s34, 0
      %p313 = por %p311, %p312
      %s315 = sadd.s32 %s314, 1
      %p318 = scmp.eq.s32.totalorder %s28, 1
      %p319 = scmp.ne.s32.totalorder %s314, %s316
      %p320 = scmp.eq.s32.totalorder %s28, 0
      %p321 = por %p319, %p320
      %p322 = scmp.ne.s32.totalorder %s314, %s316
      %p323 = scmp.eq.s32.totalorder %s33, 1
      %p324 = por %p322, %p323
      %p325 = scmp.ne.s32.totalorder %s316, %s317
      %p326 = scmp.eq.s32.totalorder %s33, 0
      %p327 = por %p325, %p326
      %p328 = scmp.ne.s32.totalorder %s316, %s317
      %p329 = scmp.eq.s32.totalorder %s34, 1
      %p330 = por %p328, %p329
      %p332 = scmp.ne.s32.totalorder %s317, %s331
      %p333 = scmp.eq.s32.totalorder %s34, 0
      %p334 = por %p332, %p333
      %s336 = sadd.s32 %s335, 1
      %p339 = scmp.eq.s32.totalorder %s28, 1
      %p340 = scmp.ne.s32.totalorder %s335, %s337
      %p341 = scmp.eq.s32.totalorder %s28, 0
      %p342 = por %p340, %p341
      %p343 = scmp.ne.s32.totalorder %s335, %s337
      %p344 = scmp.eq.s32.totalorder %s33, 1
      %p345 = por %p343, %p344
      %p346 = scmp.ne.s32.totalorder %s337, %s338
      %p347 = scmp.eq.s32.totalorder %s33, 0
      %p348 = por %p346, %p347
      %p349 = scmp.ne.s32.totalorder %s337, %s338
      %p350 = scmp.eq.s32.totalorder %s34, 1
      %p351 = por %p349, %p350
      %p353 = scmp.ne.s32.totalorder %s338, %s352
      %p354 = scmp.eq.s32.totalorder %s34, 0
      %p355 = por %p353, %p354
      %s356 = ssub.s32 %s28, %s35
      %p357 = scmp.eq.s32.totalorder %s356, 0
      %s359 = sadd.s32 %s358, 1
      %s360 = scalar_select %p357, %s358, %s359
      %p363 = pneg %p357
      %p364 = scmp.eq.s32.totalorder %s28, 1
      %p365 = por %p363, %p364
      %p366 = scmp.ne.s32.totalorder %s358, %s361
      %p367 = scmp.eq.s32.totalorder %s28, 0
      %p368 = por %p366, %p367
      %p369 = scmp.ne.s32.totalorder %s358, %s361
      %p370 = scmp.eq.s32.totalorder %s33, 1
      %p371 = por %p369, %p370
      %p372 = scmp.ne.s32.totalorder %s361, %s362
      %p373 = scmp.eq.s32.totalorder %s33, 0
      %p374 = por %p372, %p373
      %p375 = scmp.ne.s32.totalorder %s361, %s362
      %p376 = scmp.eq.s32.totalorder %s34, 1
      %p377 = por %p375, %p376
      %p379 = scmp.ne.s32.totalorder %s362, %s378
      %p380 = scmp.eq.s32.totalorder %s34, 0
      %p381 = por %p379, %p380
      %s382 = ssub.s32 %s28, %s35
      %p383 = scmp.eq.s32.totalorder %s382, 0
      %s385 = sadd.s32 %s384, 1
      %s386 = scalar_select %p383, %s384, %s385
      %p389 = pneg %p383
      %p390 = scmp.eq.s32.totalorder %s28, 1
      %p391 = por %p389, %p390
      %p392 = scmp.ne.s32.totalorder %s384, %s387
      %p393 = scmp.eq.s32.totalorder %s28, 0
      %p394 = por %p392, %p393
      %p395 = scmp.ne.s32.totalorder %s384, %s387
      %p396 = scmp.eq.s32.totalorder %s33, 1
      %p397 = por %p395, %p396
      %p398 = scmp.ne.s32.totalorder %s387, %s388
      %p399 = scmp.eq.s32.totalorder %s33, 0
      %p400 = por %p398, %p399
      %p401 = scmp.ne.s32.totalorder %s387, %s388
      %p402 = scmp.eq.s32.totalorder %s34, 1
      %p403 = por %p401, %p402
      %p405 = scmp.ne.s32.totalorder %s388, %s404
      %p406 = scmp.eq.s32.totalorder %s34, 0
      %p407 = por %p405, %p406
      %p408 = scmp.le.s32.totalorder 1, %s28
      %p409 = scmp.lt.s32.totalorder %s28, 3
      %p410 = pnand %p408, %p409
      %p411 = pneg %p410
      // Predicated region
      $region9: #{tpu_custom_call.1} parent=5 // pred_check
        _
      $region10: #{tpu_custom_call.1} parent=5 // pred_check_branch
        %413 = sbr.rel (%p410) target = $region12
      $region11: #{tpu_custom_call.1} parent=5 // pred_region
        %s414 = ssub.s32 %s28, 1
        // Predicated region
        $region13: #{tpu_custom_call.1} parent=11 // pred_check
          %p415 = pneg %p75
        $region14: #{tpu_custom_call.1} parent=11 // pred_check_branch
          %417 = sbr.rel (%p415) target = $region16
        $region15: #{tpu_custom_call.1} parent=11 // pred_region
          _
        $region16: #{tpu_custom_call.1} parent=11 // pred_fallthru
          _
        // Predicated region
        $region17: #{tpu_custom_call.1} parent=11 // pred_check
          %p418 = pneg %p96
        $region18: #{tpu_custom_call.1} parent=11 // pred_check_branch
          %420 = sbr.rel (%p418) target = $region20
        $region19: #{tpu_custom_call.1} parent=11 // pred_region
          _
        $region20: #{tpu_custom_call.1} parent=11 // pred_fallthru
          _
        // Predicated region
        $region21: #{tpu_custom_call.1} parent=11 // pred_check
          %p421 = pneg %p117
        $region22: #{tpu_custom_call.1} parent=11 // pred_check_branch
          %423 = sbr.rel (%p421) target = $region24
        $region23: #{tpu_custom_call.1} parent=11 // pred_region
          _
        $region24: #{tpu_custom_call.1} parent=11 // pred_fallthru
          _
        // Predicated region
        $region25: #{tpu_custom_call.1} parent=11 // pred_check
          %p424 = pneg %p138
        $region26: #{tpu_custom_call.1} parent=11 // pred_check_branch
          %426 = sbr.rel (%p424) target = $region28
        $region27: #{tpu_custom_call.1} parent=11 // pred_region
          _
        $region28: #{tpu_custom_call.1} parent=11 // pred_fallthru
          _
        // Predicated region
        $region29: #{tpu_custom_call.1} parent=11 // pred_check
          %p427 = pneg %p159
        $region30: #{tpu_custom_call.1} parent=11 // pred_check_branch
          %429 = sbr.rel (%p427) target = $region32
        $region31: #{tpu_custom_call.1} parent=11 // pred_region
          _
        $region32: #{tpu_custom_call.1} parent=11 // pred_fallthru
          _
        // Predicated region
        $region33: #{tpu_custom_call.1} parent=11 // pred_check
          %p430 = pneg %p180
        $region34: #{tpu_custom_call.1} parent=11 // pred_check_branch
          %432 = sbr.rel (%p430) target = $region36
        $region35: #{tpu_custom_call.1} parent=11 // pred_region
          _
        $region36: #{tpu_custom_call.1} parent=11 // pred_fallthru
          _
        // Predicated region
        $region37: #{tpu_custom_call.1} parent=11 // pred_check
          %p433 = pneg %p201
        $region38: #{tpu_custom_call.1} parent=11 // pred_check_branch
          %435 = sbr.rel (%p433) target = $region40
        $region39: #{tpu_custom_call.1} parent=11 // pred_region
          _
        $region40: #{tpu_custom_call.1} parent=11 // pred_fallthru
          _
        // Predicated region
        $region41: #{tpu_custom_call.1} parent=11 // pred_check
          %p436 = pneg %p222
        $region42: #{tpu_custom_call.1} parent=11 // pred_check_branch
          %438 = sbr.rel (%p436) target = $region44
        $region43: #{tpu_custom_call.1} parent=11 // pred_region
          _
        $region44: #{tpu_custom_call.1} parent=11 // pred_fallthru
          _
        // Predicated region
        $region45: #{tpu_custom_call.1} parent=11 // pred_check
          %p439 = pneg %p243
        $region46: #{tpu_custom_call.1} parent=11 // pred_check_branch
          %441 = sbr.rel (%p439) target = $region48
        $region47: #{tpu_custom_call.1} parent=11 // pred_region
          _
        $region48: #{tpu_custom_call.1} parent=11 // pred_fallthru
          _
        // Predicated region
        $region49: #{tpu_custom_call.1} parent=11 // pred_check
          %p442 = pneg %p264
        $region50: #{tpu_custom_call.1} parent=11 // pred_check_branch
          %444 = sbr.rel (%p442) target = $region52
        $region51: #{tpu_custom_call.1} parent=11 // pred_region
          _
        $region52: #{tpu_custom_call.1} parent=11 // pred_fallthru
          _
        // Predicated region
        $region53: #{tpu_custom_call.1} parent=11 // pred_check
          %p445 = pneg %p285
        $region54: #{tpu_custom_call.1} parent=11 // pred_check_branch
          %447 = sbr.rel (%p445) target = $region56
        $region55: #{tpu_custom_call.1} parent=11 // pred_region
          _
        $region56: #{tpu_custom_call.1} parent=11 // pred_fallthru
          _
        // Predicated region
        $region57: #{tpu_custom_call.1} parent=11 // pred_check
          %p448 = pneg %p306
        $region58: #{tpu_custom_call.1} parent=11 // pred_check_branch
          %450 = sbr.rel (%p448) target = $region60
        $region59: #{tpu_custom_call.1} parent=11 // pred_region
          _
        $region60: #{tpu_custom_call.1} parent=11 // pred_fallthru
          _
        // Predicated region
        $region61: #{tpu_custom_call.1} parent=11 // pred_check
          %p451 = pneg %p327
        $region62: #{tpu_custom_call.1} parent=11 // pred_check_branch
          %453 = sbr.rel (%p451) target = $region64
        $region63: #{tpu_custom_call.1} parent=11 // pred_region
          _
        $region64: #{tpu_custom_call.1} parent=11 // pred_fallthru
          _
        // Predicated region
        $region65: #{tpu_custom_call.1} parent=11 // pred_check
          %p454 = pneg %p348
        $region66: #{tpu_custom_call.1} parent=11 // pred_check_branch
          %456 = sbr.rel (%p454) target = $region68
        $region67: #{tpu_custom_call.1} parent=11 // pred_region
          _
        $region68: #{tpu_custom_call.1} parent=11 // pred_fallthru
          _
      $region12: #{tpu_custom_call.1} parent=5 // pred_fallthru
        _
      %p457 = scmp.lt.s32.totalorder %s28, 2
      // Predicated region
      $region69: #{tpu_custom_call.1} parent=5 // pred_check
        %p458 = pneg %p457
      $region70: #{tpu_custom_call.1} parent=5 // pred_check_branch
        %460 = sbr.rel (%p458) target = $region72
      $region71: #{tpu_custom_call.1} parent=5 // pred_region
        // Predicated region
        $region73: #{tpu_custom_call.1} parent=71 // pred_check
          %p461 = pneg %p48
        $region74: #{tpu_custom_call.1} parent=71 // pred_check_branch
          %463 = sbr.rel (%p461) target = $region76
        $region75: #{tpu_custom_call.1} parent=71 // pred_region
          %s464 = sand.u32 %s38, 1
          %s465 = scalar_lea.sflag [#allocation4], %s464
          %s466 = sand.u32 %s38, 1
          %s467 = smul.addr %s466, 512
          %s468 = scalar_lea.vmem [#allocation3], %s467
          %s469 = smul.u32 32, %s28
          %s471 = ssub.s32 8192, 8192
          %472 = vsyncadd %s465, %s471
          %s473 = smul.addr %s469, 2
          %s474 = smul.addr %s473, 128
          %s475 = scalar_lea.hbm %s0, %s474
          %s476 = sshll.u32 %s468, 4
          %s477 = int_to_ptr.vmem [resolvable:$true] %s476
          %482 = dma.hbm_to_vmem [thread:$0]  %s475, 8192, %s477, %s465, 256, 256, 16
        $region76: #{tpu_custom_call.1} parent=71 // pred_fallthru
          _
      $region72: #{tpu_custom_call.1} parent=5 // pred_fallthru
        _
      %p483 = scmp.le.s32.totalorder 1, %s28
      %p484 = scmp.lt.s32.totalorder %s28, 3
      %p485 = pnand %p483, %p484
      %p486 = pneg %p485
      // Predicated region
      $region77: #{tpu_custom_call.1} parent=5 // pred_check
        _
      $region78: #{tpu_custom_call.1} parent=5 // pred_check_branch
        %488 = sbr.rel (%p485) target = $region80
      $region79: #{tpu_custom_call.1} parent=5 // pred_region
        %s489 = ssub.s32 %s28, 1
        %s490 = sand.u32 %s41, 1
        %s491 = scalar_lea.sflag [#allocation4], %s490
        %s492 = sand.u32 %s41, 1
        %s493 = smul.addr %s492, 512
        %s494 = scalar_lea.vmem [#allocation3], %s493
        // Predicated region
        $region81: #{tpu_custom_call.1} parent=79 // pred_check
          %p495 = pneg %p54
        $region82: #{tpu_custom_call.1} parent=79 // pred_check_branch
          %497 = sbr.rel (%p495) target = $region84
        $region83: #{tpu_custom_call.1} parent=79 // pred_region
          %498 = dma.done %s491, 8192
        $region84: #{tpu_custom_call.1} parent=79 // pred_fallthru
          _
        %s499 = sand.u32 %s41, 1
        %s500 = scalar_lea.sflag [#allocation4], %s499
        %s501 = sand.u32 %s41, 1
        %s502 = smul.addr %s501, 512
        %s503 = scalar_lea.vmem [#allocation3], %s502
        %p504 = pneg %p54
        %p505 = pneg %p51
        %p506 = pneg %p75
        %p507 = pneg %p72
        %p508 = pneg %p96
        %p509 = pneg %p93
        %p510 = pneg %p117
        %p511 = pneg %p114
        %p512 = pneg %p138
        %p513 = pneg %p135
        %p514 = pneg %p159
        %p515 = pneg %p156
        %p516 = pneg %p180
        %p517 = pneg %p177
        %p518 = pneg %p201
        %p519 = pneg %p198
        %p520 = pneg %p222
        %p521 = pneg %p219
        %p522 = pneg %p243
        %p523 = pneg %p240
        %p524 = pneg %p264
        %p525 = pneg %p261
        %p526 = pneg %p285
        %p527 = pneg %p282
        %p528 = pneg %p306
        %p529 = pneg %p303
        %p530 = pneg %p327
        %p531 = pneg %p324
        %p532 = pneg %p348
        %p533 = pneg %p345
        %p534 = pneg %p374
        %p535 = pneg %p371
        %s536 = smul.u32 32, %s33
        %p537 = scmp.lt.s32.totalorder %s536, 63
        %s538 = scalar_select %p537, %s536, 63
        %s539 = smul.addr %s538, 8
        %s540 = scalar_lea.vmem %s15, %s539
        %p541 = pneg %p400
        %p542 = pneg %p397
        %s543 = smul.u32 32, %s33
        %p544 = scmp.lt.s32.totalorder %s543, 63
        %s545 = scalar_select %p544, %s543, 63
        %s546 = smul.addr %s545, 8
        %s547 = scalar_lea.vmem %s16, %s546
        %s548 = smul.u32 32, %s33
        %s549 = smul.u32 32, %s33
        %p550 = scmp.lt.s32.totalorder %s549, 63
        %s551 = scalar_select %p550, %s549, 63
        %s552 = smul.addr %s551, 8
        %s553 = scalar_lea.vmem %s15, %s552
        %s554 = smul.u32 32, %s33
        %s555 = smul.u32 32, %s33
        %p556 = scmp.lt.s32.totalorder %s555, 63
        %s557 = scalar_select %p556, %s555, 63
        %s558 = smul.addr %s557, 8
        %s559 = scalar_lea.vmem %s16, %s558
        %s560 = smul.u32 32, %s33
        %v562 = vld [vmem:[%s494] sm:$0xff]
        %v563 = vld [vmem:[%s494 + $0x8] sm:$0xff]
        %v564 = vld [vmem:[%s494 + $0x10] sm:$0xff]
        %v565 = vld [vmem:[%s494 + $0x18] sm:$0xff]
        %v566 = vld [vmem:[%s494 + $0x20] sm:$0xff]
        %v567 = vld [vmem:[%s494 + $0x28] sm:$0xff]
        %v568 = vld [vmem:[%s494 + $0x30] sm:$0xff]
        %v569 = vld [vmem:[%s494 + $0x38] sm:$0xff]
        %v570 = vld [vmem:[%s494 + $0x40] sm:$0xff]
        %v571 = vld [vmem:[%s494 + $0x48] sm:$0xff]
        %v572 = vld [vmem:[%s494 + $0x50] sm:$0xff]
        %v573 = vld [vmem:[%s494 + $0x58] sm:$0xff]
        %v574 = vld [vmem:[%s494 + $0x60] sm:$0xff]
        %v575 = vld [vmem:[%s494 + $0x68] sm:$0xff]
        %v576 = vld [vmem:[%s494 + $0x70] sm:$0xff]
        %v577 = vld [vmem:[%s494 + $0x78] sm:$0xff]
        %v578 = vld [vmem:[%s494 + $0x80] sm:$0xff]
        %v579 = vld [vmem:[%s494 + $0x88] sm:$0xff]
        %v580 = vld [vmem:[%s494 + $0x90] sm:$0xff]
        %v581 = vld [vmem:[%s494 + $0x98] sm:$0xff]
        %v582 = vld [vmem:[%s494 + $0xa0] sm:$0xff]
        %v583 = vld [vmem:[%s494 + $0xa8] sm:$0xff]
        %v584 = vld [vmem:[%s494 + $0xb0] sm:$0xff]
        %v585 = vld [vmem:[%s494 + $0xb8] sm:$0xff]
        %v586 = vld [vmem:[%s494 + $0xc0] sm:$0xff]
        %v587 = vld [vmem:[%s494 + $0xc8] sm:$0xff]
        %v588 = vld [vmem:[%s494 + $0xd0] sm:$0xff]
        %v589 = vld [vmem:[%s494 + $0xd8] sm:$0xff]
        %v590 = vld [vmem:[%s494 + $0xe0] sm:$0xff]
        %v591 = vld [vmem:[%s494 + $0xe8] sm:$0xff]
        %v592 = vld [vmem:[%s494 + $0xf0] sm:$0xff]
        %v593 = vld [vmem:[%s494 + $0xf8] sm:$0xff]
        %v594 = vld [vmem:[%s494 + $0x100] sm:$0xff]
        %v595 = vld [vmem:[%s494 + $0x108] sm:$0xff]
        %v596 = vld [vmem:[%s494 + $0x110] sm:$0xff]
        %v597 = vld [vmem:[%s494 + $0x118] sm:$0xff]
        %v598 = vld [vmem:[%s494 + $0x120] sm:$0xff]
        %v599 = vld [vmem:[%s494 + $0x128] sm:$0xff]
        %v600 = vld [vmem:[%s494 + $0x130] sm:$0xff]
        %v601 = vld [vmem:[%s494 + $0x138] sm:$0xff]
        %v602 = vld [vmem:[%s494 + $0x140] sm:$0xff]
        %v603 = vld [vmem:[%s494 + $0x148] sm:$0xff]
        %v604 = vld [vmem:[%s494 + $0x150] sm:$0xff]
        %v605 = vld [vmem:[%s494 + $0x158] sm:$0xff]
        %v606 = vld [vmem:[%s494 + $0x160] sm:$0xff]
        %v607 = vld [vmem:[%s494 + $0x168] sm:$0xff]
        %v608 = vld [vmem:[%s494 + $0x170] sm:$0xff]
        %v609 = vld [vmem:[%s494 + $0x178] sm:$0xff]
        %v610 = vld [vmem:[%s494 + $0x180] sm:$0xff]
        %v611 = vld [vmem:[%s494 + $0x188] sm:$0xff]
        %v612 = vld [vmem:[%s494 + $0x190] sm:$0xff]
        %v613 = vld [vmem:[%s494 + $0x198] sm:$0xff]
        %v614 = vld [vmem:[%s494 + $0x1a0] sm:$0xff]
        %v615 = vld [vmem:[%s494 + $0x1a8] sm:$0xff]
        %v616 = vld [vmem:[%s494 + $0x1b0] sm:$0xff]
        %v617 = vld [vmem:[%s494 + $0x1b8] sm:$0xff]
        %v618 = vld [vmem:[%s494 + $0x1c0] sm:$0xff]
        %v619 = vld [vmem:[%s494 + $0x1c8] sm:$0xff]
        %v620 = vld [vmem:[%s494 + $0x1d0] sm:$0xff]
        %v621 = vld [vmem:[%s494 + $0x1d8] sm:$0xff]
        %v622 = vld [vmem:[%s494 + $0x1e0] sm:$0xff]
        %v623 = vld [vmem:[%s494 + $0x1e8] sm:$0xff]
        %v624 = vld [vmem:[%s494 + $0x1f0] sm:$0xff]
        %v625 = vld [vmem:[%s494 + $0x1f8] sm:$0xff]
        %v626 = vpack.c.bf16 %v564, %v562
        %v627 = vpack.c.bf16 %v565, %v563
        %v628 = vpack.c.bf16 %v568, %v566
        %v629 = vpack.c.bf16 %v569, %v567
        %v630 = vpack.c.bf16 %v572, %v570
        %v631 = vpack.c.bf16 %v573, %v571
        %v632 = vpack.c.bf16 %v576, %v574
        %v633 = vpack.c.bf16 %v577, %v575
        %v634 = vpack.c.bf16 %v580, %v578
        %v635 = vpack.c.bf16 %v581, %v579
        %v636 = vpack.c.bf16 %v584, %v582
        %v637 = vpack.c.bf16 %v585, %v583
        %v638 = vpack.c.bf16 %v588, %v586
        %v639 = vpack.c.bf16 %v589, %v587
        %v640 = vpack.c.bf16 %v592, %v590
        %v641 = vpack.c.bf16 %v593, %v591
        %v642 = vpack.c.bf16 %v596, %v594
        %v643 = vpack.c.bf16 %v597, %v595
        %v644 = vpack.c.bf16 %v600, %v598
        %v645 = vpack.c.bf16 %v601, %v599
        %v646 = vpack.c.bf16 %v604, %v602
        %v647 = vpack.c.bf16 %v605, %v603
        %v648 = vpack.c.bf16 %v608, %v606
        %v649 = vpack.c.bf16 %v609, %v607
        %v650 = vpack.c.bf16 %v612, %v610
        %v651 = vpack.c.bf16 %v613, %v611
        %v652 = vpack.c.bf16 %v616, %v614
        %v653 = vpack.c.bf16 %v617, %v615
        %v654 = vpack.c.bf16 %v620, %v618
        %v655 = vpack.c.bf16 %v621, %v619
        %v656 = vpack.c.bf16 %v624, %v622
        %v657 = vpack.c.bf16 %v625, %v623
        %v658 = vld [vmem:[%s1] sm:$0xf]
        %v659 = vld [vmem:[%s1 + $0x4] sm:$0xf]
        %v660 = vld [vmem:[%s1 + $0x8] sm:$0xf]
        %v661 = vld [vmem:[%s1 + $0xc] sm:$0xf]
        %v662 = vld [vmem:[%s1 + $0x10] sm:$0xf]
        %v663 = vld [vmem:[%s1 + $0x14] sm:$0xf]
        %v664 = vld [vmem:[%s1 + $0x18] sm:$0xf]
        %v665 = vld [vmem:[%s1 + $0x1c] sm:$0xf]
        %v666 = vld [vmem:[%s1 + $0x20] sm:$0xf]
        %v667 = vld [vmem:[%s1 + $0x24] sm:$0xf]
        %v668 = vld [vmem:[%s1 + $0x28] sm:$0xf]
        %v669 = vld [vmem:[%s1 + $0x2c] sm:$0xf]
        %v670 = vld [vmem:[%s1 + $0x30] sm:$0xf]
        %v671 = vld [vmem:[%s1 + $0x34] sm:$0xf]
        %v672 = vld [vmem:[%s1 + $0x38] sm:$0xf]
        %v673 = vld [vmem:[%s1 + $0x3c] sm:$0xf]
        %v674 = vld [vmem:[%s1 + $0x40] sm:$0xf]
        %v675 = vld [vmem:[%s1 + $0x44] sm:$0xf]
        %v676 = vld [vmem:[%s1 + $0x48] sm:$0xf]
        %v677 = vld [vmem:[%s1 + $0x4c] sm:$0xf]
        %v678 = vld [vmem:[%s1 + $0x50] sm:$0xf]
        %v679 = vld [vmem:[%s1 + $0x54] sm:$0xf]
        %v680 = vld [vmem:[%s1 + $0x58] sm:$0xf]
        %v681 = vld [vmem:[%s1 + $0x5c] sm:$0xf]
        %v682 = vld [vmem:[%s1 + $0x60] sm:$0xf]
        %v683 = vld [vmem:[%s1 + $0x64] sm:$0xf]
        %v684 = vld [vmem:[%s1 + $0x68] sm:$0xf]
        %v685 = vld [vmem:[%s1 + $0x6c] sm:$0xf]
        %v686 = vld [vmem:[%s1 + $0x70] sm:$0xf]
        %v687 = vld [vmem:[%s1 + $0x74] sm:$0xf]
        %v688 = vld [vmem:[%s1 + $0x78] sm:$0xf]
        %v689 = vld [vmem:[%s1 + $0x7c] sm:$0xf]
        %v690 = vld [vmem:[%s2] sm:$0x1]
        %v692 = vlaneseq
        %v693 = vshrl.u32 %v692, 7
        %v694 = vsub.s32 0, %v693
        %v695 = vrot.slane %v690, %v694
        %v729 = vunpack.c.l.b16 %v658
        %v730 = vunpack.c.l.b16 %v659
        %v731 = vunpack.c.l.b16 %v660
        %v732 = vunpack.c.l.b16 %v661
        %v733 = vunpack.c.l.b16 %v662
        %v734 = vunpack.c.l.b16 %v663
        %v735 = vunpack.c.l.b16 %v664
        %v736 = vunpack.c.l.b16 %v665
        %v737 = vunpack.c.l.b16 %v666
        %v738 = vunpack.c.l.b16 %v667
        %v739 = vunpack.c.l.b16 %v668
        %v740 = vunpack.c.l.b16 %v669
        %v741 = vunpack.c.l.b16 %v670
        %v742 = vunpack.c.l.b16 %v671
        %v743 = vunpack.c.l.b16 %v672
        %v744 = vunpack.c.l.b16 %v673
        %v745 = vunpack.c.l.b16 %v674
        %v746 = vunpack.c.l.b16 %v675
        %v747 = vunpack.c.l.b16 %v676
        %v748 = vunpack.c.l.b16 %v677
        %v749 = vunpack.c.l.b16 %v678
        %v750 = vunpack.c.l.b16 %v679
        %v751 = vunpack.c.l.b16 %v680
        %v752 = vunpack.c.l.b16 %v681
        %v753 = vunpack.c.l.b16 %v682
        %v754 = vunpack.c.l.b16 %v683
        %v755 = vunpack.c.l.b16 %v684
        %v756 = vunpack.c.l.b16 %v685
        %v757 = vunpack.c.l.b16 %v686
        %v758 = vunpack.c.l.b16 %v687
        %v759 = vunpack.c.l.b16 %v688
        %v760 = vunpack.c.l.b16 %v689
        %v761 = vpack.c.b16 %v730, %v729
        %v762 = vpack.c.b16 %v732, %v731
        %v763 = vpack.c.b16 %v734, %v733
        %v764 = vpack.c.b16 %v736, %v735
        %v765 = vpack.c.b16 %v738, %v737
        %v766 = vpack.c.b16 %v740, %v739
        %v767 = vpack.c.b16 %v742, %v741
        %v768 = vpack.c.b16 %v744, %v743
        %v769 = vpack.c.b16 %v746, %v745
        %v770 = vpack.c.b16 %v748, %v747
        %v771 = vpack.c.b16 %v750, %v749
        %v772 = vpack.c.b16 %v752, %v751
        %v773 = vpack.c.b16 %v754, %v753
        %v774 = vpack.c.b16 %v756, %v755
        %v775 = vpack.c.b16 %v758, %v757
        %v776 = vpack.c.b16 %v760, %v759
        %793 = vmatprep.subr.bf16.mxu0 0
        %794 = vmatpush1.bf16.msra.mxu0 %v768
        %795 = vmatprep.subr.bf16.mxu0 0
        %796 = vmatpush1.bf16.msra.mxu0 %v767
        %797 = vmatprep.subr.bf16.mxu0 0
        %798 = vmatpush1.bf16.msra.mxu0 %v766
        %799 = vmatprep.subr.bf16.mxu0 0
        %800 = vmatpush1.bf16.msra.mxu0 %v765
        %801 = vmatprep.subr.bf16.mxu0 0
        %802 = vmatpush1.bf16.msra.mxu0 %v764
        %803 = vmatprep.subr.bf16.mxu0 0
        %804 = vmatpush1.bf16.msra.mxu0 %v763
        %805 = vmatprep.subr.bf16.mxu0 0
        %806 = vmatpush1.bf16.msra.mxu0 %v762
        %807 = vmatprep.subr.bf16.mxu0 0
        %808 = vmatpush1.bf16.msra.mxu0 %v761
        %809 = vmatprep.subr.bf16.mxu0 0
        %810 = vmatpush2.bf16.msra.mxu0 %v776
        %811 = vmatprep.subr.bf16.mxu0 0
        %812 = vmatpush2.bf16.msra.mxu0 %v775
        %813 = vmatprep.subr.bf16.mxu0 0
        %814 = vmatpush2.bf16.msra.mxu0 %v774
        %815 = vmatprep.subr.bf16.mxu0 0
        %816 = vmatpush2.bf16.msra.mxu0 %v773
        %817 = vmatprep.subr.bf16.mxu0 0
        %818 = vmatpush2.bf16.msra.mxu0 %v772
        %819 = vmatprep.subr.bf16.mxu0 0
        %820 = vmatpush2.bf16.msra.mxu0 %v771
        %821 = vmatprep.subr.bf16.mxu0 0
        %822 = vmatpush2.bf16.msra.mxu0 %v770
        %823 = vmatprep.subr.bf16.mxu0 0
        %824 = vmatpush2.bf16.msra.mxu0 %v769
        %825 = vmatprep.mubr.bf16.mxu0 %v627
        %826 = vmatmul.mubr.bf16.gmra.mxu0 %v626
        %v827 = vpop.f32.mrf.mxu0
        %v828 = vadd.f32 %v695, %v827
        %v829 = vpop.f32.mrf.mxu0
        %v830 = vpop.f32.mrf.mxu0
        %v831 = vadd.f32 %v695, %v830
        %v832 = vpop.f32.mrf.mxu0
        %833 = vmatprep.mubr.bf16.mxu0 %v629
        %834 = vmatmul.mubr.bf16.gmra.mxu0 %v628
        %v835 = vpop.f32.mrf.mxu0
        %v836 = vadd.f32 %v695, %v835
        %v837 = vpop.f32.mrf.mxu0
        %v838 = vpop.f32.mrf.mxu0
        %v839 = vadd.f32 %v695, %v838
        %v840 = vpop.f32.mrf.mxu0
        %841 = vmatprep.mubr.bf16.mxu0 %v631
        %842 = vmatmul.mubr.bf16.gmra.mxu0 %v630
        %v843 = vpop.f32.mrf.mxu0
        %v844 = vadd.f32 %v695, %v843
        %v845 = vpop.f32.mrf.mxu0
        %v846 = vpop.f32.mrf.mxu0
        %v847 = vadd.f32 %v695, %v846
        %v848 = vpop.f32.mrf.mxu0
        %849 = vmatprep.mubr.bf16.mxu0 %v633
        %850 = vmatmul.mubr.bf16.gmra.mxu0 %v632
        %v851 = vpop.f32.mrf.mxu0
        %v852 = vadd.f32 %v695, %v851
        %v853 = vpop.f32.mrf.mxu0
        %v854 = vpop.f32.mrf.mxu0
        %v855 = vadd.f32 %v695, %v854
        %v856 = vpop.f32.mrf.mxu0
        %857 = vmatprep.mubr.bf16.mxu0 %v635
        %858 = vmatmul.mubr.bf16.gmra.mxu0 %v634
        %v859 = vpop.f32.mrf.mxu0
        %v860 = vadd.f32 %v695, %v859
        %v861 = vpop.f32.mrf.mxu0
        %v862 = vpop.f32.mrf.mxu0
        %v863 = vadd.f32 %v695, %v862
        %v864 = vpop.f32.mrf.mxu0
        %865 = vmatprep.mubr.bf16.mxu0 %v637
        %866 = vmatmul.mubr.bf16.gmra.mxu0 %v636
        %v867 = vpop.f32.mrf.mxu0
        %v868 = vadd.f32 %v695, %v867
        %v869 = vpop.f32.mrf.mxu0
        %v870 = vpop.f32.mrf.mxu0
        %v871 = vadd.f32 %v695, %v870
        %v872 = vpop.f32.mrf.mxu0
        %873 = vmatprep.mubr.bf16.mxu0 %v639
        %874 = vmatmul.mubr.bf16.gmra.mxu0 %v638
        %v875 = vpop.f32.mrf.mxu0
        %v876 = vadd.f32 %v695, %v875
        %v877 = vpop.f32.mrf.mxu0
        %v878 = vpop.f32.mrf.mxu0
        %v879 = vadd.f32 %v695, %v878
        %v880 = vpop.f32.mrf.mxu0
        %881 = vmatprep.mubr.bf16.mxu0 %v641
        %882 = vmatmul.mubr.bf16.gmra.mxu0 %v640
        %v883 = vpop.f32.mrf.mxu0
        %v884 = vadd.f32 %v695, %v883
        %v885 = vpop.f32.mrf.mxu0
        %v886 = vpop.f32.mrf.mxu0
        %v887 = vadd.f32 %v695, %v886
        %v888 = vpop.f32.mrf.mxu0
        %889 = vmatprep.mubr.bf16.mxu0 %v643
        %890 = vmatmul.mubr.bf16.gmra.mxu0 %v642
        %v891 = vpop.f32.mrf.mxu0
        %v892 = vadd.f32 %v695, %v891
        %v893 = vpop.f32.mrf.mxu0
        %v894 = vpop.f32.mrf.mxu0
        %v895 = vadd.f32 %v695, %v894
        %v896 = vpop.f32.mrf.mxu0
        %897 = vmatprep.mubr.bf16.mxu0 %v645
        %898 = vmatmul.mubr.bf16.gmra.mxu0 %v644
        %v899 = vpop.f32.mrf.mxu0
        %v900 = vadd.f32 %v695, %v899
        %v901 = vpop.f32.mrf.mxu0
        %v902 = vpop.f32.mrf.mxu0
        %v903 = vadd.f32 %v695, %v902
        %v904 = vpop.f32.mrf.mxu0
        %905 = vmatprep.mubr.bf16.mxu0 %v647
        %906 = vmatmul.mubr.bf16.gmra.mxu0 %v646
        %v907 = vpop.f32.mrf.mxu0
        %v908 = vadd.f32 %v695, %v907
        %v909 = vpop.f32.mrf.mxu0
        %v910 = vpop.f32.mrf.mxu0
        %v911 = vadd.f32 %v695, %v910
        %v912 = vpop.f32.mrf.mxu0
        %913 = vmatprep.mubr.bf16.mxu0 %v649
        %914 = vmatmul.mubr.bf16.gmra.mxu0 %v648
        %v915 = vpop.f32.mrf.mxu0
        %v916 = vadd.f32 %v695, %v915
        %v917 = vpop.f32.mrf.mxu0
        %v918 = vpop.f32.mrf.mxu0
        %v919 = vadd.f32 %v695, %v918
        %v920 = vpop.f32.mrf.mxu0
        %921 = vmatprep.mubr.bf16.mxu0 %v651
        %922 = vmatmul.mubr.bf16.gmra.mxu0 %v650
        %v923 = vpop.f32.mrf.mxu0
        %v924 = vadd.f32 %v695, %v923
        %v925 = vpop.f32.mrf.mxu0
        %v926 = vpop.f32.mrf.mxu0
        %v927 = vadd.f32 %v695, %v926
        %v928 = vpop.f32.mrf.mxu0
        %929 = vmatprep.mubr.bf16.mxu0 %v653
        %930 = vmatmul.mubr.bf16.gmra.mxu0 %v652
        %v931 = vpop.f32.mrf.mxu0
        %v932 = vadd.f32 %v695, %v931
        %v933 = vpop.f32.mrf.mxu0
        %v934 = vpop.f32.mrf.mxu0
        %v935 = vadd.f32 %v695, %v934
        %v936 = vpop.f32.mrf.mxu0
        %937 = vmatprep.mubr.bf16.mxu0 %v655
        %938 = vmatmul.mubr.bf16.gmra.mxu0 %v654
        %v939 = vpop.f32.mrf.mxu0
        %v940 = vadd.f32 %v695, %v939
        %v941 = vpop.f32.mrf.mxu0
        %v942 = vpop.f32.mrf.mxu0
        %v943 = vadd.f32 %v695, %v942
        %v944 = vpop.f32.mrf.mxu0
        %945 = vmatprep.mubr.bf16.mxu0 %v657
        %946 = vmatmul.mubr.bf16.gmra.mxu0 %v656
        %v947 = vpop.f32.mrf.mxu0
        %v948 = vadd.f32 %v695, %v947
        %v949 = vpop.f32.mrf.mxu0
        %v950 = vpop.f32.mrf.mxu0
        %v951 = vadd.f32 %v695, %v950
        %v952 = vpop.f32.mrf.mxu0
        %953 = vdwg.mxu0
        %v954 = vmul.f32 %v828, 0.01
        %v955 = vmul.f32 %v831, 0.01
        %v956 = vmul.f32 %v836, 0.01
        %v957 = vmul.f32 %v839, 0.01
        %v958 = vmul.f32 %v844, 0.01
        %v959 = vmul.f32 %v847, 0.01
        %v960 = vmul.f32 %v852, 0.01
        %v961 = vmul.f32 %v855, 0.01
        %v962 = vmul.f32 %v860, 0.01
        %v963 = vmul.f32 %v863, 0.01
        %v964 = vmul.f32 %v868, 0.01
        %v965 = vmul.f32 %v871, 0.01
        %v966 = vmul.f32 %v876, 0.01
        %v967 = vmul.f32 %v879, 0.01
        %v968 = vmul.f32 %v884, 0.01
        %v969 = vmul.f32 %v887, 0.01
        %v970 = vmul.f32 %v892, 0.01
        %v971 = vmul.f32 %v895, 0.01
        %v972 = vmul.f32 %v900, 0.01
        %v973 = vmul.f32 %v903, 0.01
        %v974 = vmul.f32 %v908, 0.01
        %v975 = vmul.f32 %v911, 0.01
        %v976 = vmul.f32 %v916, 0.01
        %v977 = vmul.f32 %v919, 0.01
        %v978 = vmul.f32 %v924, 0.01
        %v979 = vmul.f32 %v927, 0.01
        %v980 = vmul.f32 %v932, 0.01
        %v981 = vmul.f32 %v935, 0.01
        %v982 = vmul.f32 %v940, 0.01
        %v983 = vmul.f32 %v943, 0.01
        %v984 = vmul.f32 %v948, 0.01
        %v985 = vmul.f32 %v951, 0.01
        %v986 = vmax.f32 %v828, %v954
        %v987 = vmax.f32 %v831, %v955
        %v988 = vmax.f32 %v836, %v956
        %v989 = vmax.f32 %v839, %v957
        %v990 = vmax.f32 %v844, %v958
        %v991 = vmax.f32 %v847, %v959
        %v992 = vmax.f32 %v852, %v960
        %v993 = vmax.f32 %v855, %v961
        %v994 = vmax.f32 %v860, %v962
        %v995 = vmax.f32 %v863, %v963
        %v996 = vmax.f32 %v868, %v964
        %v997 = vmax.f32 %v871, %v965
        %v998 = vmax.f32 %v876, %v966
        %v999 = vmax.f32 %v879, %v967
        %v1000 = vmax.f32 %v884, %v968
        %v1001 = vmax.f32 %v887, %v969
        %v1002 = vmax.f32 %v892, %v970
        %v1003 = vmax.f32 %v895, %v971
        %v1004 = vmax.f32 %v900, %v972
        %v1005 = vmax.f32 %v903, %v973
        %v1006 = vmax.f32 %v908, %v974
        %v1007 = vmax.f32 %v911, %v975
        %v1008 = vmax.f32 %v916, %v976
        %v1009 = vmax.f32 %v919, %v977
        %v1010 = vmax.f32 %v924, %v978
        %v1011 = vmax.f32 %v927, %v979
        %v1012 = vmax.f32 %v932, %v980
        %v1013 = vmax.f32 %v935, %v981
        %v1014 = vmax.f32 %v940, %v982
        %v1015 = vmax.f32 %v943, %v983
        %v1016 = vmax.f32 %v948, %v984
        %v1017 = vmax.f32 %v951, %v985
        %v1018 = vpack.c.bf16 %v987, %v986
        %v1019 = vpack.c.bf16 %v989, %v988
        %v1020 = vpack.c.bf16 %v991, %v990
        %v1021 = vpack.c.bf16 %v993, %v992
        %v1022 = vpack.c.bf16 %v995, %v994
        %v1023 = vpack.c.bf16 %v997, %v996
        %v1024 = vpack.c.bf16 %v999, %v998
        %v1025 = vpack.c.bf16 %v1001, %v1000
        %v1026 = vpack.c.bf16 %v1003, %v1002
        %v1027 = vpack.c.bf16 %v1005, %v1004
        %v1028 = vpack.c.bf16 %v1007, %v1006
        %v1029 = vpack.c.bf16 %v1009, %v1008
        %v1030 = vpack.c.bf16 %v1011, %v1010
        %v1031 = vpack.c.bf16 %v1013, %v1012
        %v1032 = vpack.c.bf16 %v1015, %v1014
        %v1033 = vpack.c.bf16 %v1017, %v1016
        %v1034 = vld [vmem:[%s3] sm:$0xf]
        %v1035 = vld [vmem:[%s3 + $0x4] sm:$0xf]
        %v1036 = vld [vmem:[%s3 + $0x8] sm:$0xf]
        %v1037 = vld [vmem:[%s3 + $0xc] sm:$0xf]
        %v1038 = vld [vmem:[%s3 + $0x10] sm:$0xf]
        %v1039 = vld [vmem:[%s3 + $0x14] sm:$0xf]
        %v1040 = vld [vmem:[%s3 + $0x18] sm:$0xf]
        %v1041 = vld [vmem:[%s3 + $0x1c] sm:$0xf]
        %v1042 = vld [vmem:[%s4] sm:$0x1]
        %v1044 = vlaneseq
        %v1045 = vshrl.u32 %v1044, 7
        %v1046 = vsub.s32 0, %v1045
        %v1047 = vrot.slane %v1042, %v1046
        %v1057 = vunpack.c.l.b16 %v1034
        %v1058 = vunpack.c.l.b16 %v1035
        %v1059 = vunpack.c.l.b16 %v1036
        %v1060 = vunpack.c.l.b16 %v1037
        %v1061 = vunpack.c.l.b16 %v1038
        %v1062 = vunpack.c.l.b16 %v1039
        %v1063 = vunpack.c.l.b16 %v1040
        %v1064 = vunpack.c.l.b16 %v1041
        %v1065 = vpack.c.b16 %v1058, %v1057
        %v1066 = vpack.c.b16 %v1060, %v1059
        %v1067 = vpack.c.b16 %v1062, %v1061
        %v1068 = vpack.c.b16 %v1064, %v1063
        %vm1073 = vcmask 523264
        %v1075 = vsel %vm1073, %v1018, 0
        %v1078 = vsel %vm1073, %v1019, 0
        %v1081 = vsel %vm1073, %v1020, 0
        %v1084 = vsel %vm1073, %v1021, 0
        %v1087 = vsel %vm1073, %v1022, 0
        %v1090 = vsel %vm1073, %v1023, 0
        %v1093 = vsel %vm1073, %v1024, 0
        %v1096 = vsel %vm1073, %v1025, 0
        %v1099 = vsel %vm1073, %v1026, 0
        %v1102 = vsel %vm1073, %v1027, 0
        %v1105 = vsel %vm1073, %v1028, 0
        %v1108 = vsel %vm1073, %v1029, 0
        %v1111 = vsel %vm1073, %v1030, 0
        %v1114 = vsel %vm1073, %v1031, 0
        %v1117 = vsel %vm1073, %v1032, 0
        %v1120 = vsel %vm1073, %v1033, 0
        %1122 = vmatprep.subr.bf16.mxu0 0
        %1123 = vmatpush1.bf16.msra.mxu0 0
        %1124 = vmatprep.subr.bf16.mxu0 0
        %1125 = vmatpush1.bf16.msra.mxu0 0
        %1126 = vmatprep.subr.bf16.mxu0 0
        %1127 = vmatpush1.bf16.msra.mxu0 0
        %1128 = vmatprep.subr.bf16.mxu0 0
        %1129 = vmatpush1.bf16.msra.mxu0 0
        %1130 = vmatprep.subr.bf16.mxu0 0
        %1131 = vmatpush1.bf16.msra.mxu0 %v1068
        %1132 = vmatprep.subr.bf16.mxu0 0
        %1133 = vmatpush1.bf16.msra.mxu0 %v1067
        %1134 = vmatprep.subr.bf16.mxu0 0
        %1135 = vmatpush1.bf16.msra.mxu0 %v1066
        %1136 = vmatprep.subr.bf16.mxu0 0
        %1137 = vmatpush1.bf16.msra.mxu0 %v1065
        %1138 = vmatprep.subr.bf16.mxu0 0
        %1139 = vmatpush2.bf16.msra.mxu0 0
        %1140 = vmatprep.subr.bf16.mxu0 0
        %1141 = vmatpush2.bf16.msra.mxu0 0
        %1142 = vmatprep.subr.bf16.mxu0 0
        %1143 = vmatpush2.bf16.msra.mxu0 0
        %1144 = vmatprep.subr.bf16.mxu0 0
        %1145 = vmatpush2.bf16.msra.mxu0 0
        %1146 = vmatprep.subr.bf16.mxu0 0
        %1147 = vmatpush2.bf16.msra.mxu0 0
        %1148 = vmatprep.subr.bf16.mxu0 0
        %1149 = vmatpush2.bf16.msra.mxu0 0
        %1150 = vmatprep.subr.bf16.mxu0 0
        %1151 = vmatpush2.bf16.msra.mxu0 0
        %1152 = vmatprep.subr.bf16.mxu0 0
        %1153 = vmatpush2.bf16.msra.mxu0 0
        %1154 = vmatprep.mubr.bf16.mxu0 0
        %1155 = vmatmul.mubr.bf16.gmra.mxu0 %v1075
        %v1156 = vpop.f32.mrf.mxu0
        %v1157 = vadd.f32 %v1047, %v1156
        %v1158 = vpop.f32.mrf.mxu0
        %v1159 = vpop.f32.mrf.mxu0
        %v1160 = vadd.f32 %v1047, %v1159
        %v1161 = vpop.f32.mrf.mxu0
        %1162 = vmatprep.mubr.bf16.mxu0 0
        %1163 = vmatmul.mubr.bf16.gmra.mxu0 %v1078
        %v1164 = vpop.f32.mrf.mxu0
        %v1165 = vadd.f32 %v1047, %v1164
        %v1166 = vpop.f32.mrf.mxu0
        %v1167 = vpop.f32.mrf.mxu0
        %v1168 = vadd.f32 %v1047, %v1167
        %v1169 = vpop.f32.mrf.mxu0
        %1170 = vmatprep.mubr.bf16.mxu0 0
        %1171 = vmatmul.mubr.bf16.gmra.mxu0 %v1081
        %v1172 = vpop.f32.mrf.mxu0
        %v1173 = vadd.f32 %v1047, %v1172
        %v1174 = vpop.f32.mrf.mxu0
        %v1175 = vpop.f32.mrf.mxu0
        %v1176 = vadd.f32 %v1047, %v1175
        %v1177 = vpop.f32.mrf.mxu0
        %1178 = vmatprep.mubr.bf16.mxu0 0
        %1179 = vmatmul.mubr.bf16.gmra.mxu0 %v1084
        %v1180 = vpop.f32.mrf.mxu0
        %v1181 = vadd.f32 %v1047, %v1180
        %v1182 = vpop.f32.mrf.mxu0
        %v1183 = vpop.f32.mrf.mxu0
        %v1184 = vadd.f32 %v1047, %v1183
        %v1185 = vpop.f32.mrf.mxu0
        %1186 = vmatprep.mubr.bf16.mxu0 0
        %1187 = vmatmul.mubr.bf16.gmra.mxu0 %v1087
        %v1188 = vpop.f32.mrf.mxu0
        %v1189 = vadd.f32 %v1047, %v1188
        %v1190 = vpop.f32.mrf.mxu0
        %v1191 = vpop.f32.mrf.mxu0
        %v1192 = vadd.f32 %v1047, %v1191
        %v1193 = vpop.f32.mrf.mxu0
        %1194 = vmatprep.mubr.bf16.mxu0 0
        %1195 = vmatmul.mubr.bf16.gmra.mxu0 %v1090
        %v1196 = vpop.f32.mrf.mxu0
        %v1197 = vadd.f32 %v1047, %v1196
        %v1198 = vpop.f32.mrf.mxu0
        %v1199 = vpop.f32.mrf.mxu0
        %v1200 = vadd.f32 %v1047, %v1199
        %v1201 = vpop.f32.mrf.mxu0
        %1202 = vmatprep.mubr.bf16.mxu0 0
        %1203 = vmatmul.mubr.bf16.gmra.mxu0 %v1093
        %v1204 = vpop.f32.mrf.mxu0
        %v1205 = vadd.f32 %v1047, %v1204
        %v1206 = vpop.f32.mrf.mxu0
        %v1207 = vpop.f32.mrf.mxu0
        %v1208 = vadd.f32 %v1047, %v1207
        %v1209 = vpop.f32.mrf.mxu0
        %1210 = vmatprep.mubr.bf16.mxu0 0
        %1211 = vmatmul.mubr.bf16.gmra.mxu0 %v1096
        %v1212 = vpop.f32.mrf.mxu0
        %v1213 = vadd.f32 %v1047, %v1212
        %v1214 = vpop.f32.mrf.mxu0
        %v1215 = vpop.f32.mrf.mxu0
        %v1216 = vadd.f32 %v1047, %v1215
        %v1217 = vpop.f32.mrf.mxu0
        %1218 = vmatprep.mubr.bf16.mxu0 0
        %1219 = vmatmul.mubr.bf16.gmra.mxu0 %v1099
        %v1220 = vpop.f32.mrf.mxu0
        %v1221 = vadd.f32 %v1047, %v1220
        %v1222 = vpop.f32.mrf.mxu0
        %v1223 = vpop.f32.mrf.mxu0
        %v1224 = vadd.f32 %v1047, %v1223
        %v1225 = vpop.f32.mrf.mxu0
        %1226 = vmatprep.mubr.bf16.mxu0 0
        %1227 = vmatmul.mubr.bf16.gmra.mxu0 %v1102
        %v1228 = vpop.f32.mrf.mxu0
        %v1229 = vadd.f32 %v1047, %v1228
        %v1230 = vpop.f32.mrf.mxu0
        %v1231 = vpop.f32.mrf.mxu0
        %v1232 = vadd.f32 %v1047, %v1231
        %v1233 = vpop.f32.mrf.mxu0
        %1234 = vmatprep.mubr.bf16.mxu0 0
        %1235 = vmatmul.mubr.bf16.gmra.mxu0 %v1105
        %v1236 = vpop.f32.mrf.mxu0
        %v1237 = vadd.f32 %v1047, %v1236
        %v1238 = vpop.f32.mrf.mxu0
        %v1239 = vpop.f32.mrf.mxu0
        %v1240 = vadd.f32 %v1047, %v1239
        %v1241 = vpop.f32.mrf.mxu0
        %1242 = vmatprep.mubr.bf16.mxu0 0
        %1243 = vmatmul.mubr.bf16.gmra.mxu0 %v1108
        %v1244 = vpop.f32.mrf.mxu0
        %v1245 = vadd.f32 %v1047, %v1244
        %v1246 = vpop.f32.mrf.mxu0
        %v1247 = vpop.f32.mrf.mxu0
        %v1248 = vadd.f32 %v1047, %v1247
        %v1249 = vpop.f32.mrf.mxu0
        %1250 = vmatprep.mubr.bf16.mxu0 0
        %1251 = vmatmul.mubr.bf16.gmra.mxu0 %v1111
        %v1252 = vpop.f32.mrf.mxu0
        %v1253 = vadd.f32 %v1047, %v1252
        %v1254 = vpop.f32.mrf.mxu0
        %v1255 = vpop.f32.mrf.mxu0
        %v1256 = vadd.f32 %v1047, %v1255
        %v1257 = vpop.f32.mrf.mxu0
        %1258 = vmatprep.mubr.bf16.mxu0 0
        %1259 = vmatmul.mubr.bf16.gmra.mxu0 %v1114
        %v1260 = vpop.f32.mrf.mxu0
        %v1261 = vadd.f32 %v1047, %v1260
        %v1262 = vpop.f32.mrf.mxu0
        %v1263 = vpop.f32.mrf.mxu0
        %v1264 = vadd.f32 %v1047, %v1263
        %v1265 = vpop.f32.mrf.mxu0
        %1266 = vmatprep.mubr.bf16.mxu0 0
        %1267 = vmatmul.mubr.bf16.gmra.mxu0 %v1117
        %v1268 = vpop.f32.mrf.mxu0
        %v1269 = vadd.f32 %v1047, %v1268
        %v1270 = vpop.f32.mrf.mxu0
        %v1271 = vpop.f32.mrf.mxu0
        %v1272 = vadd.f32 %v1047, %v1271
        %v1273 = vpop.f32.mrf.mxu0
        %1274 = vmatprep.mubr.bf16.mxu0 0
        %1275 = vmatmul.mubr.bf16.gmra.mxu0 %v1120
        %v1276 = vpop.f32.mrf.mxu0
        %v1277 = vadd.f32 %v1047, %v1276
        %v1278 = vpop.f32.mrf.mxu0
        %v1279 = vpop.f32.mrf.mxu0
        %v1280 = vadd.f32 %v1047, %v1279
        %v1281 = vpop.f32.mrf.mxu0
        %1282 = vdwg.mxu0
        %v1283 = vmul.f32 %v1157, 0.01
        %v1284 = vmul.f32 %v1160, 0.01
        %v1285 = vmul.f32 %v1165, 0.01
        %v1286 = vmul.f32 %v1168, 0.01
        %v1287 = vmul.f32 %v1173, 0.01
        %v1288 = vmul.f32 %v1176, 0.01
        %v1289 = vmul.f32 %v1181, 0.01
        %v1290 = vmul.f32 %v1184, 0.01
        %v1291 = vmul.f32 %v1189, 0.01
        %v1292 = vmul.f32 %v1192, 0.01
        %v1293 = vmul.f32 %v1197, 0.01
        %v1294 = vmul.f32 %v1200, 0.01
        %v1295 = vmul.f32 %v1205, 0.01
        %v1296 = vmul.f32 %v1208, 0.01
        %v1297 = vmul.f32 %v1213, 0.01
        %v1298 = vmul.f32 %v1216, 0.01
        %v1299 = vmul.f32 %v1221, 0.01
        %v1300 = vmul.f32 %v1224, 0.01
        %v1301 = vmul.f32 %v1229, 0.01
        %v1302 = vmul.f32 %v1232, 0.01
        %v1303 = vmul.f32 %v1237, 0.01
        %v1304 = vmul.f32 %v1240, 0.01
        %v1305 = vmul.f32 %v1245, 0.01
        %v1306 = vmul.f32 %v1248, 0.01
        %v1307 = vmul.f32 %v1253, 0.01
        %v1308 = vmul.f32 %v1256, 0.01
        %v1309 = vmul.f32 %v1261, 0.01
        %v1310 = vmul.f32 %v1264, 0.01
        %v1311 = vmul.f32 %v1269, 0.01
        %v1312 = vmul.f32 %v1272, 0.01
        %v1313 = vmul.f32 %v1277, 0.01
        %v1314 = vmul.f32 %v1280, 0.01
        %v1315 = vmax.f32 %v1157, %v1283
        %v1316 = vmax.f32 %v1160, %v1284
        %v1317 = vmax.f32 %v1165, %v1285
        %v1318 = vmax.f32 %v1168, %v1286
        %v1319 = vmax.f32 %v1173, %v1287
        %v1320 = vmax.f32 %v1176, %v1288
        %v1321 = vmax.f32 %v1181, %v1289
        %v1322 = vmax.f32 %v1184, %v1290
        %v1323 = vmax.f32 %v1189, %v1291
        %v1324 = vmax.f32 %v1192, %v1292
        %v1325 = vmax.f32 %v1197, %v1293
        %v1326 = vmax.f32 %v1200, %v1294
        %v1327 = vmax.f32 %v1205, %v1295
        %v1328 = vmax.f32 %v1208, %v1296
        %v1329 = vmax.f32 %v1213, %v1297
        %v1330 = vmax.f32 %v1216, %v1298
        %v1331 = vmax.f32 %v1221, %v1299
        %v1332 = vmax.f32 %v1224, %v1300
        %v1333 = vmax.f32 %v1229, %v1301
        %v1334 = vmax.f32 %v1232, %v1302
        %v1335 = vmax.f32 %v1237, %v1303
        %v1336 = vmax.f32 %v1240, %v1304
        %v1337 = vmax.f32 %v1245, %v1305
        %v1338 = vmax.f32 %v1248, %v1306
        %v1339 = vmax.f32 %v1253, %v1307
        %v1340 = vmax.f32 %v1256, %v1308
        %v1341 = vmax.f32 %v1261, %v1309
        %v1342 = vmax.f32 %v1264, %v1310
        %v1343 = vmax.f32 %v1269, %v1311
        %v1344 = vmax.f32 %v1272, %v1312
        %v1345 = vmax.f32 %v1277, %v1313
        %v1346 = vmax.f32 %v1280, %v1314
        %v1347 = vpack.c.bf16 %v1316, %v1315
        %v1348 = vpack.c.bf16 %v1318, %v1317
        %v1349 = vpack.c.bf16 %v1320, %v1319
        %v1350 = vpack.c.bf16 %v1322, %v1321
        %v1351 = vpack.c.bf16 %v1324, %v1323
        %v1352 = vpack.c.bf16 %v1326, %v1325
        %v1353 = vpack.c.bf16 %v1328, %v1327
        %v1354 = vpack.c.bf16 %v1330, %v1329
        %v1355 = vpack.c.bf16 %v1332, %v1331
        %v1356 = vpack.c.bf16 %v1334, %v1333
        %v1357 = vpack.c.bf16 %v1336, %v1335
        %v1358 = vpack.c.bf16 %v1338, %v1337
        %v1359 = vpack.c.bf16 %v1340, %v1339
        %v1360 = vpack.c.bf16 %v1342, %v1341
        %v1361 = vpack.c.bf16 %v1344, %v1343
        %v1362 = vpack.c.bf16 %v1346, %v1345
        %v1363 = vld [vmem:[%s5] sm:$0xf]
        %v1364 = vld [vmem:[%s5 + $0x4] sm:$0xf]
        %v1365 = vld [vmem:[%s5 + $0x8] sm:$0xf]
        %v1366 = vld [vmem:[%s5 + $0xc] sm:$0xf]
        %v1367 = vld [vmem:[%s5 + $0x10] sm:$0xf]
        %v1368 = vld [vmem:[%s5 + $0x14] sm:$0xf]
        %v1369 = vld [vmem:[%s5 + $0x18] sm:$0xf]
        %v1370 = vld [vmem:[%s5 + $0x1c] sm:$0xf]
        %v1371 = vld [vmem:[%s6] sm:$0x1]
        %v1373 = vlaneseq
        %v1374 = vshrl.u32 %v1373, 7
        %v1375 = vsub.s32 0, %v1374
        %v1376 = vrot.slane %v1371, %v1375
        %v1386 = vunpack.c.l.b16 %v1363
        %v1387 = vunpack.c.l.b16 %v1364
        %v1388 = vunpack.c.l.b16 %v1365
        %v1389 = vunpack.c.l.b16 %v1366
        %v1390 = vunpack.c.l.b16 %v1367
        %v1391 = vunpack.c.l.b16 %v1368
        %v1392 = vunpack.c.l.b16 %v1369
        %v1393 = vunpack.c.l.b16 %v1370
        %v1394 = vpack.c.b16 %v1387, %v1386
        %v1395 = vpack.c.b16 %v1389, %v1388
        %v1396 = vpack.c.b16 %v1391, %v1390
        %v1397 = vpack.c.b16 %v1393, %v1392
        %v1403 = vsel %vm1073, %v1347, 0
        %v1406 = vsel %vm1073, %v1348, 0
        %v1409 = vsel %vm1073, %v1349, 0
        %v1412 = vsel %vm1073, %v1350, 0
        %v1415 = vsel %vm1073, %v1351, 0
        %v1418 = vsel %vm1073, %v1352, 0
        %v1421 = vsel %vm1073, %v1353, 0
        %v1424 = vsel %vm1073, %v1354, 0
        %v1427 = vsel %vm1073, %v1355, 0
        %v1430 = vsel %vm1073, %v1356, 0
        %v1433 = vsel %vm1073, %v1357, 0
        %v1436 = vsel %vm1073, %v1358, 0
        %v1439 = vsel %vm1073, %v1359, 0
        %v1442 = vsel %vm1073, %v1360, 0
        %v1445 = vsel %vm1073, %v1361, 0
        %v1448 = vsel %vm1073, %v1362, 0
        %1450 = vmatprep.subr.bf16.mxu0 0
        %1451 = vmatpush1.bf16.msra.mxu0 0
        %1452 = vmatprep.subr.bf16.mxu0 0
        %1453 = vmatpush1.bf16.msra.mxu0 0
        %1454 = vmatprep.subr.bf16.mxu0 0
        %1455 = vmatpush1.bf16.msra.mxu0 0
        %1456 = vmatprep.subr.bf16.mxu0 0
        %1457 = vmatpush1.bf16.msra.mxu0 0
        %1458 = vmatprep.subr.bf16.mxu0 0
        %1459 = vmatpush1.bf16.msra.mxu0 %v1397
        %1460 = vmatprep.subr.bf16.mxu0 0
        %1461 = vmatpush1.bf16.msra.mxu0 %v1396
        %1462 = vmatprep.subr.bf16.mxu0 0
        %1463 = vmatpush1.bf16.msra.mxu0 %v1395
        %1464 = vmatprep.subr.bf16.mxu0 0
        %1465 = vmatpush1.bf16.msra.mxu0 %v1394
        %1466 = vmatprep.subr.bf16.mxu0 0
        %1467 = vmatpush2.bf16.msra.mxu0 0
        %1468 = vmatprep.subr.bf16.mxu0 0
        %1469 = vmatpush2.bf16.msra.mxu0 0
        %1470 = vmatprep.subr.bf16.mxu0 0
        %1471 = vmatpush2.bf16.msra.mxu0 0
        %1472 = vmatprep.subr.bf16.mxu0 0
        %1473 = vmatpush2.bf16.msra.mxu0 0
        %1474 = vmatprep.subr.bf16.mxu0 0
        %1475 = vmatpush2.bf16.msra.mxu0 0
        %1476 = vmatprep.subr.bf16.mxu0 0
        %1477 = vmatpush2.bf16.msra.mxu0 0
        %1478 = vmatprep.subr.bf16.mxu0 0
        %1479 = vmatpush2.bf16.msra.mxu0 0
        %1480 = vmatprep.subr.bf16.mxu0 0
        %1481 = vmatpush2.bf16.msra.mxu0 0
        %1482 = vmatprep.mubr.bf16.mxu0 0
        %1483 = vmatmul.mubr.bf16.gmra.mxu0 %v1403
        %v1484 = vpop.f32.mrf.mxu0
        %v1485 = vadd.f32 %v1376, %v1484
        %v1486 = vpop.f32.mrf.mxu0
        %v1487 = vpop.f32.mrf.mxu0
        %v1488 = vadd.f32 %v1376, %v1487
        %v1489 = vpop.f32.mrf.mxu0
        %1490 = vmatprep.mubr.bf16.mxu0 0
        %1491 = vmatmul.mubr.bf16.gmra.mxu0 %v1406
        %v1492 = vpop.f32.mrf.mxu0
        %v1493 = vadd.f32 %v1376, %v1492
        %v1494 = vpop.f32.mrf.mxu0
        %v1495 = vpop.f32.mrf.mxu0
        %v1496 = vadd.f32 %v1376, %v1495
        %v1497 = vpop.f32.mrf.mxu0
        %1498 = vmatprep.mubr.bf16.mxu0 0
        %1499 = vmatmul.mubr.bf16.gmra.mxu0 %v1409
        %v1500 = vpop.f32.mrf.mxu0
        %v1501 = vadd.f32 %v1376, %v1500
        %v1502 = vpop.f32.mrf.mxu0
        %v1503 = vpop.f32.mrf.mxu0
        %v1504 = vadd.f32 %v1376, %v1503
        %v1505 = vpop.f32.mrf.mxu0
        %1506 = vmatprep.mubr.bf16.mxu0 0
        %1507 = vmatmul.mubr.bf16.gmra.mxu0 %v1412
        %v1508 = vpop.f32.mrf.mxu0
        %v1509 = vadd.f32 %v1376, %v1508
        %v1510 = vpop.f32.mrf.mxu0
        %v1511 = vpop.f32.mrf.mxu0
        %v1512 = vadd.f32 %v1376, %v1511
        %v1513 = vpop.f32.mrf.mxu0
        %1514 = vmatprep.mubr.bf16.mxu0 0
        %1515 = vmatmul.mubr.bf16.gmra.mxu0 %v1415
        %v1516 = vpop.f32.mrf.mxu0
        %v1517 = vadd.f32 %v1376, %v1516
        %v1518 = vpop.f32.mrf.mxu0
        %v1519 = vpop.f32.mrf.mxu0
        %v1520 = vadd.f32 %v1376, %v1519
        %v1521 = vpop.f32.mrf.mxu0
        %1522 = vmatprep.mubr.bf16.mxu0 0
        %1523 = vmatmul.mubr.bf16.gmra.mxu0 %v1418
        %v1524 = vpop.f32.mrf.mxu0
        %v1525 = vadd.f32 %v1376, %v1524
        %v1526 = vpop.f32.mrf.mxu0
        %v1527 = vpop.f32.mrf.mxu0
        %v1528 = vadd.f32 %v1376, %v1527
        %v1529 = vpop.f32.mrf.mxu0
        %1530 = vmatprep.mubr.bf16.mxu0 0
        %1531 = vmatmul.mubr.bf16.gmra.mxu0 %v1421
        %v1532 = vpop.f32.mrf.mxu0
        %v1533 = vadd.f32 %v1376, %v1532
        %v1534 = vpop.f32.mrf.mxu0
        %v1535 = vpop.f32.mrf.mxu0
        %v1536 = vadd.f32 %v1376, %v1535
        %v1537 = vpop.f32.mrf.mxu0
        %1538 = vmatprep.mubr.bf16.mxu0 0
        %1539 = vmatmul.mubr.bf16.gmra.mxu0 %v1424
        %v1540 = vpop.f32.mrf.mxu0
        %v1541 = vadd.f32 %v1376, %v1540
        %v1542 = vpop.f32.mrf.mxu0
        %v1543 = vpop.f32.mrf.mxu0
        %v1544 = vadd.f32 %v1376, %v1543
        %v1545 = vpop.f32.mrf.mxu0
        %1546 = vmatprep.mubr.bf16.mxu0 0
        %1547 = vmatmul.mubr.bf16.gmra.mxu0 %v1427
        %v1548 = vpop.f32.mrf.mxu0
        %v1549 = vadd.f32 %v1376, %v1548
        %v1550 = vpop.f32.mrf.mxu0
        %v1551 = vpop.f32.mrf.mxu0
        %v1552 = vadd.f32 %v1376, %v1551
        %v1553 = vpop.f32.mrf.mxu0
        %1554 = vmatprep.mubr.bf16.mxu0 0
        %1555 = vmatmul.mubr.bf16.gmra.mxu0 %v1430
        %v1556 = vpop.f32.mrf.mxu0
        %v1557 = vadd.f32 %v1376, %v1556
        %v1558 = vpop.f32.mrf.mxu0
        %v1559 = vpop.f32.mrf.mxu0
        %v1560 = vadd.f32 %v1376, %v1559
        %v1561 = vpop.f32.mrf.mxu0
        %1562 = vmatprep.mubr.bf16.mxu0 0
        %1563 = vmatmul.mubr.bf16.gmra.mxu0 %v1433
        %v1564 = vpop.f32.mrf.mxu0
        %v1565 = vadd.f32 %v1376, %v1564
        %v1566 = vpop.f32.mrf.mxu0
        %v1567 = vpop.f32.mrf.mxu0
        %v1568 = vadd.f32 %v1376, %v1567
        %v1569 = vpop.f32.mrf.mxu0
        %1570 = vmatprep.mubr.bf16.mxu0 0
        %1571 = vmatmul.mubr.bf16.gmra.mxu0 %v1436
        %v1572 = vpop.f32.mrf.mxu0
        %v1573 = vadd.f32 %v1376, %v1572
        %v1574 = vpop.f32.mrf.mxu0
        %v1575 = vpop.f32.mrf.mxu0
        %v1576 = vadd.f32 %v1376, %v1575
        %v1577 = vpop.f32.mrf.mxu0
        %1578 = vmatprep.mubr.bf16.mxu0 0
        %1579 = vmatmul.mubr.bf16.gmra.mxu0 %v1439
        %v1580 = vpop.f32.mrf.mxu0
        %v1581 = vadd.f32 %v1376, %v1580
        %v1582 = vpop.f32.mrf.mxu0
        %v1583 = vpop.f32.mrf.mxu0
        %v1584 = vadd.f32 %v1376, %v1583
        %v1585 = vpop.f32.mrf.mxu0
        %1586 = vmatprep.mubr.bf16.mxu0 0
        %1587 = vmatmul.mubr.bf16.gmra.mxu0 %v1442
        %v1588 = vpop.f32.mrf.mxu0
        %v1589 = vadd.f32 %v1376, %v1588
        %v1590 = vpop.f32.mrf.mxu0
        %v1591 = vpop.f32.mrf.mxu0
        %v1592 = vadd.f32 %v1376, %v1591
        %v1593 = vpop.f32.mrf.mxu0
        %1594 = vmatprep.mubr.bf16.mxu0 0
        %1595 = vmatmul.mubr.bf16.gmra.mxu0 %v1445
        %v1596 = vpop.f32.mrf.mxu0
        %v1597 = vadd.f32 %v1376, %v1596
        %v1598 = vpop.f32.mrf.mxu0
        %v1599 = vpop.f32.mrf.mxu0
        %v1600 = vadd.f32 %v1376, %v1599
        %v1601 = vpop.f32.mrf.mxu0
        %1602 = vmatprep.mubr.bf16.mxu0 0
        %1603 = vmatmul.mubr.bf16.gmra.mxu0 %v1448
        %v1604 = vpop.f32.mrf.mxu0
        %v1605 = vadd.f32 %v1376, %v1604
        %v1606 = vpop.f32.mrf.mxu0
        %v1607 = vpop.f32.mrf.mxu0
        %v1608 = vadd.f32 %v1376, %v1607
        %v1609 = vpop.f32.mrf.mxu0
        %1610 = vdwg.mxu0
        %v1611 = vmul.f32 %v1485, 0.01
        %v1612 = vmul.f32 %v1488, 0.01
        %v1613 = vmul.f32 %v1493, 0.01
        %v1614 = vmul.f32 %v1496, 0.01
        %v1615 = vmul.f32 %v1501, 0.01
        %v1616 = vmul.f32 %v1504, 0.01
        %v1617 = vmul.f32 %v1509, 0.01
        %v1618 = vmul.f32 %v1512, 0.01
        %v1619 = vmul.f32 %v1517, 0.01
        %v1620 = vmul.f32 %v1520, 0.01
        %v1621 = vmul.f32 %v1525, 0.01
        %v1622 = vmul.f32 %v1528, 0.01
        %v1623 = vmul.f32 %v1533, 0.01
        %v1624 = vmul.f32 %v1536, 0.01
        %v1625 = vmul.f32 %v1541, 0.01
        %v1626 = vmul.f32 %v1544, 0.01
        %v1627 = vmul.f32 %v1549, 0.01
        %v1628 = vmul.f32 %v1552, 0.01
        %v1629 = vmul.f32 %v1557, 0.01
        %v1630 = vmul.f32 %v1560, 0.01
        %v1631 = vmul.f32 %v1565, 0.01
        %v1632 = vmul.f32 %v1568, 0.01
        %v1633 = vmul.f32 %v1573, 0.01
        %v1634 = vmul.f32 %v1576, 0.01
        %v1635 = vmul.f32 %v1581, 0.01
        %v1636 = vmul.f32 %v1584, 0.01
        %v1637 = vmul.f32 %v1589, 0.01
        %v1638 = vmul.f32 %v1592, 0.01
        %v1639 = vmul.f32 %v1597, 0.01
        %v1640 = vmul.f32 %v1600, 0.01
        %v1641 = vmul.f32 %v1605, 0.01
        %v1642 = vmul.f32 %v1608, 0.01
        %v1643 = vmax.f32 %v1485, %v1611
        %v1644 = vmax.f32 %v1488, %v1612
        %v1645 = vmax.f32 %v1493, %v1613
        %v1646 = vmax.f32 %v1496, %v1614
        %v1647 = vmax.f32 %v1501, %v1615
        %v1648 = vmax.f32 %v1504, %v1616
        %v1649 = vmax.f32 %v1509, %v1617
        %v1650 = vmax.f32 %v1512, %v1618
        %v1651 = vmax.f32 %v1517, %v1619
        %v1652 = vmax.f32 %v1520, %v1620
        %v1653 = vmax.f32 %v1525, %v1621
        %v1654 = vmax.f32 %v1528, %v1622
        %v1655 = vmax.f32 %v1533, %v1623
        %v1656 = vmax.f32 %v1536, %v1624
        %v1657 = vmax.f32 %v1541, %v1625
        %v1658 = vmax.f32 %v1544, %v1626
        %v1659 = vmax.f32 %v1549, %v1627
        %v1660 = vmax.f32 %v1552, %v1628
        %v1661 = vmax.f32 %v1557, %v1629
        %v1662 = vmax.f32 %v1560, %v1630
        %v1663 = vmax.f32 %v1565, %v1631
        %v1664 = vmax.f32 %v1568, %v1632
        %v1665 = vmax.f32 %v1573, %v1633
        %v1666 = vmax.f32 %v1576, %v1634
        %v1667 = vmax.f32 %v1581, %v1635
        %v1668 = vmax.f32 %v1584, %v1636
        %v1669 = vmax.f32 %v1589, %v1637
        %v1670 = vmax.f32 %v1592, %v1638
        %v1671 = vmax.f32 %v1597, %v1639
        %v1672 = vmax.f32 %v1600, %v1640
        %v1673 = vmax.f32 %v1605, %v1641
        %v1674 = vmax.f32 %v1608, %v1642
        %v1675 = vpack.c.bf16 %v1644, %v1643
        %v1676 = vpack.c.bf16 %v1646, %v1645
        %v1677 = vpack.c.bf16 %v1648, %v1647
        %v1678 = vpack.c.bf16 %v1650, %v1649
        %v1679 = vpack.c.bf16 %v1652, %v1651
        %v1680 = vpack.c.bf16 %v1654, %v1653
        %v1681 = vpack.c.bf16 %v1656, %v1655
        %v1682 = vpack.c.bf16 %v1658, %v1657
        %v1683 = vpack.c.bf16 %v1660, %v1659
        %v1684 = vpack.c.bf16 %v1662, %v1661
        %v1685 = vpack.c.bf16 %v1664, %v1663
        %v1686 = vpack.c.bf16 %v1666, %v1665
        %v1687 = vpack.c.bf16 %v1668, %v1667
        %v1688 = vpack.c.bf16 %v1670, %v1669
        %v1689 = vpack.c.bf16 %v1672, %v1671
        %v1690 = vpack.c.bf16 %v1674, %v1673
        %v1691 = vld [vmem:[%s7] sm:$0xf]
        %v1692 = vld [vmem:[%s7 + $0x4] sm:$0xf]
        %v1693 = vld [vmem:[%s7 + $0x8] sm:$0xf]
        %v1694 = vld [vmem:[%s7 + $0xc] sm:$0xf]
        %v1695 = vld [vmem:[%s7 + $0x10] sm:$0xf]
        %v1696 = vld [vmem:[%s7 + $0x14] sm:$0xf]
        %v1697 = vld [vmem:[%s7 + $0x18] sm:$0xf]
        %v1698 = vld [vmem:[%s7 + $0x1c] sm:$0xf]
        %v1699 = vld [vmem:[%s8] sm:$0x1]
        %v1701 = vlaneseq
        %v1702 = vshrl.u32 %v1701, 7
        %v1703 = vsub.s32 0, %v1702
        %v1704 = vrot.slane %v1699, %v1703
        %v1714 = vunpack.c.l.b16 %v1691
        %v1715 = vunpack.c.l.b16 %v1692
        %v1716 = vunpack.c.l.b16 %v1693
        %v1717 = vunpack.c.l.b16 %v1694
        %v1718 = vunpack.c.l.b16 %v1695
        %v1719 = vunpack.c.l.b16 %v1696
        %v1720 = vunpack.c.l.b16 %v1697
        %v1721 = vunpack.c.l.b16 %v1698
        %v1722 = vpack.c.b16 %v1715, %v1714
        %v1723 = vpack.c.b16 %v1717, %v1716
        %v1724 = vpack.c.b16 %v1719, %v1718
        %v1725 = vpack.c.b16 %v1721, %v1720
        %v1731 = vsel %vm1073, %v1675, 0
        %v1734 = vsel %vm1073, %v1676, 0
        %v1737 = vsel %vm1073, %v1677, 0
        %v1740 = vsel %vm1073, %v1678, 0
        %v1743 = vsel %vm1073, %v1679, 0
        %v1746 = vsel %vm1073, %v1680, 0
        %v1749 = vsel %vm1073, %v1681, 0
        %v1752 = vsel %vm1073, %v1682, 0
        %v1755 = vsel %vm1073, %v1683, 0
        %v1758 = vsel %vm1073, %v1684, 0
        %v1761 = vsel %vm1073, %v1685, 0
        %v1764 = vsel %vm1073, %v1686, 0
        %v1767 = vsel %vm1073, %v1687, 0
        %v1770 = vsel %vm1073, %v1688, 0
        %v1773 = vsel %vm1073, %v1689, 0
        %v1776 = vsel %vm1073, %v1690, 0
        %1778 = vmatprep.subr.bf16.mxu0 0
        %1779 = vmatpush1.bf16.msra.mxu0 0
        %1780 = vmatprep.subr.bf16.mxu0 0
        %1781 = vmatpush1.bf16.msra.mxu0 0
        %1782 = vmatprep.subr.bf16.mxu0 0
        %1783 = vmatpush1.bf16.msra.mxu0 0
        %1784 = vmatprep.subr.bf16.mxu0 0
        %1785 = vmatpush1.bf16.msra.mxu0 0
        %1786 = vmatprep.subr.bf16.mxu0 0
        %1787 = vmatpush1.bf16.msra.mxu0 %v1725
        %1788 = vmatprep.subr.bf16.mxu0 0
        %1789 = vmatpush1.bf16.msra.mxu0 %v1724
        %1790 = vmatprep.subr.bf16.mxu0 0
        %1791 = vmatpush1.bf16.msra.mxu0 %v1723
        %1792 = vmatprep.subr.bf16.mxu0 0
        %1793 = vmatpush1.bf16.msra.mxu0 %v1722
        %1794 = vmatprep.subr.bf16.mxu0 0
        %1795 = vmatpush2.bf16.msra.mxu0 0
        %1796 = vmatprep.subr.bf16.mxu0 0
        %1797 = vmatpush2.bf16.msra.mxu0 0
        %1798 = vmatprep.subr.bf16.mxu0 0
        %1799 = vmatpush2.bf16.msra.mxu0 0
        %1800 = vmatprep.subr.bf16.mxu0 0
        %1801 = vmatpush2.bf16.msra.mxu0 0
        %1802 = vmatprep.subr.bf16.mxu0 0
        %1803 = vmatpush2.bf16.msra.mxu0 0
        %1804 = vmatprep.subr.bf16.mxu0 0
        %1805 = vmatpush2.bf16.msra.mxu0 0
        %1806 = vmatprep.subr.bf16.mxu0 0
        %1807 = vmatpush2.bf16.msra.mxu0 0
        %1808 = vmatprep.subr.bf16.mxu0 0
        %1809 = vmatpush2.bf16.msra.mxu0 0
        %1810 = vmatprep.mubr.bf16.mxu0 0
        %1811 = vmatmul.mubr.bf16.gmra.mxu0 %v1731
        %v1812 = vpop.f32.mrf.mxu0
        %v1813 = vadd.f32 %v1704, %v1812
        %v1814 = vpop.f32.mrf.mxu0
        %v1815 = vpop.f32.mrf.mxu0
        %v1816 = vadd.f32 %v1704, %v1815
        %v1817 = vpop.f32.mrf.mxu0
        %1818 = vmatprep.mubr.bf16.mxu0 0
        %1819 = vmatmul.mubr.bf16.gmra.mxu0 %v1734
        %v1820 = vpop.f32.mrf.mxu0
        %v1821 = vadd.f32 %v1704, %v1820
        %v1822 = vpop.f32.mrf.mxu0
        %v1823 = vpop.f32.mrf.mxu0
        %v1824 = vadd.f32 %v1704, %v1823
        %v1825 = vpop.f32.mrf.mxu0
        %1826 = vmatprep.mubr.bf16.mxu0 0
        %1827 = vmatmul.mubr.bf16.gmra.mxu0 %v1737
        %v1828 = vpop.f32.mrf.mxu0
        %v1829 = vadd.f32 %v1704, %v1828
        %v1830 = vpop.f32.mrf.mxu0
        %v1831 = vpop.f32.mrf.mxu0
        %v1832 = vadd.f32 %v1704, %v1831
        %v1833 = vpop.f32.mrf.mxu0
        %1834 = vmatprep.mubr.bf16.mxu0 0
        %1835 = vmatmul.mubr.bf16.gmra.mxu0 %v1740
        %v1836 = vpop.f32.mrf.mxu0
        %v1837 = vadd.f32 %v1704, %v1836
        %v1838 = vpop.f32.mrf.mxu0
        %v1839 = vpop.f32.mrf.mxu0
        %v1840 = vadd.f32 %v1704, %v1839
        %v1841 = vpop.f32.mrf.mxu0
        %1842 = vmatprep.mubr.bf16.mxu0 0
        %1843 = vmatmul.mubr.bf16.gmra.mxu0 %v1743
        %v1844 = vpop.f32.mrf.mxu0
        %v1845 = vadd.f32 %v1704, %v1844
        %v1846 = vpop.f32.mrf.mxu0
        %v1847 = vpop.f32.mrf.mxu0
        %v1848 = vadd.f32 %v1704, %v1847
        %v1849 = vpop.f32.mrf.mxu0
        %1850 = vmatprep.mubr.bf16.mxu0 0
        %1851 = vmatmul.mubr.bf16.gmra.mxu0 %v1746
        %v1852 = vpop.f32.mrf.mxu0
        %v1853 = vadd.f32 %v1704, %v1852
        %v1854 = vpop.f32.mrf.mxu0
        %v1855 = vpop.f32.mrf.mxu0
        %v1856 = vadd.f32 %v1704, %v1855
        %v1857 = vpop.f32.mrf.mxu0
        %1858 = vmatprep.mubr.bf16.mxu0 0
        %1859 = vmatmul.mubr.bf16.gmra.mxu0 %v1749
        %v1860 = vpop.f32.mrf.mxu0
        %v1861 = vadd.f32 %v1704, %v1860
        %v1862 = vpop.f32.mrf.mxu0
        %v1863 = vpop.f32.mrf.mxu0
        %v1864 = vadd.f32 %v1704, %v1863
        %v1865 = vpop.f32.mrf.mxu0
        %1866 = vmatprep.mubr.bf16.mxu0 0
        %1867 = vmatmul.mubr.bf16.gmra.mxu0 %v1752
        %v1868 = vpop.f32.mrf.mxu0
        %v1869 = vadd.f32 %v1704, %v1868
        %v1870 = vpop.f32.mrf.mxu0
        %v1871 = vpop.f32.mrf.mxu0
        %v1872 = vadd.f32 %v1704, %v1871
        %v1873 = vpop.f32.mrf.mxu0
        %1874 = vmatprep.mubr.bf16.mxu0 0
        %1875 = vmatmul.mubr.bf16.gmra.mxu0 %v1755
        %v1876 = vpop.f32.mrf.mxu0
        %v1877 = vadd.f32 %v1704, %v1876
        %v1878 = vpop.f32.mrf.mxu0
        %v1879 = vpop.f32.mrf.mxu0
        %v1880 = vadd.f32 %v1704, %v1879
        %v1881 = vpop.f32.mrf.mxu0
        %1882 = vmatprep.mubr.bf16.mxu0 0
        %1883 = vmatmul.mubr.bf16.gmra.mxu0 %v1758
        %v1884 = vpop.f32.mrf.mxu0
        %v1885 = vadd.f32 %v1704, %v1884
        %v1886 = vpop.f32.mrf.mxu0
        %v1887 = vpop.f32.mrf.mxu0
        %v1888 = vadd.f32 %v1704, %v1887
        %v1889 = vpop.f32.mrf.mxu0
        %1890 = vmatprep.mubr.bf16.mxu0 0
        %1891 = vmatmul.mubr.bf16.gmra.mxu0 %v1761
        %v1892 = vpop.f32.mrf.mxu0
        %v1893 = vadd.f32 %v1704, %v1892
        %v1894 = vpop.f32.mrf.mxu0
        %v1895 = vpop.f32.mrf.mxu0
        %v1896 = vadd.f32 %v1704, %v1895
        %v1897 = vpop.f32.mrf.mxu0
        %1898 = vmatprep.mubr.bf16.mxu0 0
        %1899 = vmatmul.mubr.bf16.gmra.mxu0 %v1764
        %v1900 = vpop.f32.mrf.mxu0
        %v1901 = vadd.f32 %v1704, %v1900
        %v1902 = vpop.f32.mrf.mxu0
        %v1903 = vpop.f32.mrf.mxu0
        %v1904 = vadd.f32 %v1704, %v1903
        %v1905 = vpop.f32.mrf.mxu0
        %1906 = vmatprep.mubr.bf16.mxu0 0
        %1907 = vmatmul.mubr.bf16.gmra.mxu0 %v1767
        %v1908 = vpop.f32.mrf.mxu0
        %v1909 = vadd.f32 %v1704, %v1908
        %v1910 = vpop.f32.mrf.mxu0
        %v1911 = vpop.f32.mrf.mxu0
        %v1912 = vadd.f32 %v1704, %v1911
        %v1913 = vpop.f32.mrf.mxu0
        %1914 = vmatprep.mubr.bf16.mxu0 0
        %1915 = vmatmul.mubr.bf16.gmra.mxu0 %v1770
        %v1916 = vpop.f32.mrf.mxu0
        %v1917 = vadd.f32 %v1704, %v1916
        %v1918 = vpop.f32.mrf.mxu0
        %v1919 = vpop.f32.mrf.mxu0
        %v1920 = vadd.f32 %v1704, %v1919
        %v1921 = vpop.f32.mrf.mxu0
        %1922 = vmatprep.mubr.bf16.mxu0 0
        %1923 = vmatmul.mubr.bf16.gmra.mxu0 %v1773
        %v1924 = vpop.f32.mrf.mxu0
        %v1925 = vadd.f32 %v1704, %v1924
        %v1926 = vpop.f32.mrf.mxu0
        %v1927 = vpop.f32.mrf.mxu0
        %v1928 = vadd.f32 %v1704, %v1927
        %v1929 = vpop.f32.mrf.mxu0
        %1930 = vmatprep.mubr.bf16.mxu0 0
        %1931 = vmatmul.mubr.bf16.gmra.mxu0 %v1776
        %v1932 = vpop.f32.mrf.mxu0
        %v1933 = vadd.f32 %v1704, %v1932
        %v1934 = vpop.f32.mrf.mxu0
        %v1935 = vpop.f32.mrf.mxu0
        %v1936 = vadd.f32 %v1704, %v1935
        %v1937 = vpop.f32.mrf.mxu0
        %1938 = vdwg.mxu0
        %v1939 = vpack.c.bf16 %v1816, %v1813
        %v1940 = vpack.c.bf16 %v1824, %v1821
        %v1941 = vpack.c.bf16 %v1832, %v1829
        %v1942 = vpack.c.bf16 %v1840, %v1837
        %v1943 = vpack.c.bf16 %v1848, %v1845
        %v1944 = vpack.c.bf16 %v1856, %v1853
        %v1945 = vpack.c.bf16 %v1864, %v1861
        %v1946 = vpack.c.bf16 %v1872, %v1869
        %v1947 = vpack.c.bf16 %v1880, %v1877
        %v1948 = vpack.c.bf16 %v1888, %v1885
        %v1949 = vpack.c.bf16 %v1896, %v1893
        %v1950 = vpack.c.bf16 %v1904, %v1901
        %v1951 = vpack.c.bf16 %v1912, %v1909
        %v1952 = vpack.c.bf16 %v1920, %v1917
        %v1953 = vpack.c.bf16 %v1928, %v1925
        %v1954 = vpack.c.bf16 %v1936, %v1933
        %v1955 = vld [vmem:[%s9] sm:$0xf]
        %v1956 = vld [vmem:[%s10] sm:$0x1]
        %v1958 = vlaneseq
        %v1959 = vshrl.u32 %v1958, 7
        %v1960 = vsub.s32 0, %v1959
        %v1961 = vrot.slane %v1956, %v1960
        %vm1963 = vcmask 64512
        %v1965 = vsel %vm1963, %v1939, 0
        %v1968 = vsel %vm1963, %v1940, 0
        %v1971 = vsel %vm1963, %v1941, 0
        %v1974 = vsel %vm1963, %v1942, 0
        %v1977 = vsel %vm1963, %v1943, 0
        %v1980 = vsel %vm1963, %v1944, 0
        %v1983 = vsel %vm1963, %v1945, 0
        %v1986 = vsel %vm1963, %v1946, 0
        %v1989 = vsel %vm1963, %v1947, 0
        %v1992 = vsel %vm1963, %v1948, 0
        %v1995 = vsel %vm1963, %v1949, 0
        %v1998 = vsel %vm1963, %v1950, 0
        %v2001 = vsel %vm1963, %v1951, 0
        %v2004 = vsel %vm1963, %v1952, 0
        %v2007 = vsel %vm1963, %v1953, 0
        %v2010 = vsel %vm1963, %v1954, 0
        %vm2012 = vcmask 1043456
        %v2014 = vsel %vm2012, %v1955, 0
        %2016 = vmatprep.subr.bf16.mxu0 0
        %2017 = vmatpush1.bf16.msra.mxu0 0
        %2018 = vmatprep.subr.bf16.mxu0 0
        %2019 = vmatpush1.bf16.msra.mxu0 0
        %2020 = vmatprep.subr.bf16.mxu0 0
        %2021 = vmatpush1.bf16.msra.mxu0 0
        %2022 = vmatprep.subr.bf16.mxu0 0
        %2023 = vmatpush1.bf16.msra.mxu0 0
        %2024 = vmatprep.subr.bf16.mxu0 0
        %2025 = vmatpush1.bf16.msra.mxu0 0
        %2026 = vmatprep.subr.bf16.mxu0 0
        %2027 = vmatpush1.bf16.msra.mxu0 0
        %2028 = vmatprep.subr.bf16.mxu0 0
        %2029 = vmatpush1.bf16.msra.mxu0 0
        %2030 = vmatprep.subr.bf16.mxu0 0
        %2031 = vmatpush1.bf16.msra.mxu0 %v2014
        %2032 = vmatprep.subr.bf16.mxu0 0
        %2033 = vmatpush2.bf16.msra.mxu0 0
        %2034 = vmatprep.subr.bf16.mxu0 0
        %2035 = vmatpush2.bf16.msra.mxu0 0
        %2036 = vmatprep.subr.bf16.mxu0 0
        %2037 = vmatpush2.bf16.msra.mxu0 0
        %2038 = vmatprep.subr.bf16.mxu0 0
        %2039 = vmatpush2.bf16.msra.mxu0 0
        %2040 = vmatprep.subr.bf16.mxu0 0
        %2041 = vmatpush2.bf16.msra.mxu0 0
        %2042 = vmatprep.subr.bf16.mxu0 0
        %2043 = vmatpush2.bf16.msra.mxu0 0
        %2044 = vmatprep.subr.bf16.mxu0 0
        %2045 = vmatpush2.bf16.msra.mxu0 0
        %2046 = vmatprep.subr.bf16.mxu0 0
        %2047 = vmatpush2.bf16.msra.mxu0 0
        %2048 = vmatprep.mubr.bf16.mxu0 0
        %2049 = vmatmul.mubr.bf16.gmra.mxu0 %v1965
        %v2050 = vpop.f32.mrf.mxu0
        %v2051 = vadd.f32 %v1961, %v2050
        %v2052 = vpop.f32.mrf.mxu0
        %v2053 = vpop.f32.mrf.mxu0
        %v2054 = vadd.f32 %v1961, %v2053
        %v2055 = vpop.f32.mrf.mxu0
        %2056 = vmatprep.mubr.bf16.mxu0 0
        %2057 = vmatmul.mubr.bf16.gmra.mxu0 %v1968
        %v2058 = vpop.f32.mrf.mxu0
        %v2059 = vadd.f32 %v1961, %v2058
        %v2060 = vpop.f32.mrf.mxu0
        %v2061 = vpop.f32.mrf.mxu0
        %v2062 = vadd.f32 %v1961, %v2061
        %v2063 = vpop.f32.mrf.mxu0
        %2064 = vmatprep.mubr.bf16.mxu0 0
        %2065 = vmatmul.mubr.bf16.gmra.mxu0 %v1971
        %v2066 = vpop.f32.mrf.mxu0
        %v2067 = vadd.f32 %v1961, %v2066
        %v2068 = vpop.f32.mrf.mxu0
        %v2069 = vpop.f32.mrf.mxu0
        %v2070 = vadd.f32 %v1961, %v2069
        %v2071 = vpop.f32.mrf.mxu0
        %2072 = vmatprep.mubr.bf16.mxu0 0
        %2073 = vmatmul.mubr.bf16.gmra.mxu0 %v1974
        %v2074 = vpop.f32.mrf.mxu0
        %v2075 = vadd.f32 %v1961, %v2074
        %v2076 = vpop.f32.mrf.mxu0
        %v2077 = vpop.f32.mrf.mxu0
        %v2078 = vadd.f32 %v1961, %v2077
        %v2079 = vpop.f32.mrf.mxu0
        %2080 = vmatprep.mubr.bf16.mxu0 0
        %2081 = vmatmul.mubr.bf16.gmra.mxu0 %v1977
        %v2082 = vpop.f32.mrf.mxu0
        %v2083 = vadd.f32 %v1961, %v2082
        %v2084 = vpop.f32.mrf.mxu0
        %v2085 = vpop.f32.mrf.mxu0
        %v2086 = vadd.f32 %v1961, %v2085
        %v2087 = vpop.f32.mrf.mxu0
        %2088 = vmatprep.mubr.bf16.mxu0 0
        %2089 = vmatmul.mubr.bf16.gmra.mxu0 %v1980
        %v2090 = vpop.f32.mrf.mxu0
        %v2091 = vadd.f32 %v1961, %v2090
        %v2092 = vpop.f32.mrf.mxu0
        %v2093 = vpop.f32.mrf.mxu0
        %v2094 = vadd.f32 %v1961, %v2093
        %v2095 = vpop.f32.mrf.mxu0
        %2096 = vmatprep.mubr.bf16.mxu0 0
        %2097 = vmatmul.mubr.bf16.gmra.mxu0 %v1983
        %v2098 = vpop.f32.mrf.mxu0
        %v2099 = vadd.f32 %v1961, %v2098
        %v2100 = vpop.f32.mrf.mxu0
        %v2101 = vpop.f32.mrf.mxu0
        %v2102 = vadd.f32 %v1961, %v2101
        %v2103 = vpop.f32.mrf.mxu0
        %2104 = vmatprep.mubr.bf16.mxu0 0
        %2105 = vmatmul.mubr.bf16.gmra.mxu0 %v1986
        %v2106 = vpop.f32.mrf.mxu0
        %v2107 = vadd.f32 %v1961, %v2106
        %v2108 = vpop.f32.mrf.mxu0
        %v2109 = vpop.f32.mrf.mxu0
        %v2110 = vadd.f32 %v1961, %v2109
        %v2111 = vpop.f32.mrf.mxu0
        %2112 = vmatprep.mubr.bf16.mxu0 0
        %2113 = vmatmul.mubr.bf16.gmra.mxu0 %v1989
        %v2114 = vpop.f32.mrf.mxu0
        %v2115 = vadd.f32 %v1961, %v2114
        %v2116 = vpop.f32.mrf.mxu0
        %v2117 = vpop.f32.mrf.mxu0
        %v2118 = vadd.f32 %v1961, %v2117
        %v2119 = vpop.f32.mrf.mxu0
        %2120 = vmatprep.mubr.bf16.mxu0 0
        %2121 = vmatmul.mubr.bf16.gmra.mxu0 %v1992
        %v2122 = vpop.f32.mrf.mxu0
        %v2123 = vadd.f32 %v1961, %v2122
        %v2124 = vpop.f32.mrf.mxu0
        %v2125 = vpop.f32.mrf.mxu0
        %v2126 = vadd.f32 %v1961, %v2125
        %v2127 = vpop.f32.mrf.mxu0
        %2128 = vmatprep.mubr.bf16.mxu0 0
        %2129 = vmatmul.mubr.bf16.gmra.mxu0 %v1995
        %v2130 = vpop.f32.mrf.mxu0
        %v2131 = vadd.f32 %v1961, %v2130
        %v2132 = vpop.f32.mrf.mxu0
        %v2133 = vpop.f32.mrf.mxu0
        %v2134 = vadd.f32 %v1961, %v2133
        %v2135 = vpop.f32.mrf.mxu0
        %2136 = vmatprep.mubr.bf16.mxu0 0
        %2137 = vmatmul.mubr.bf16.gmra.mxu0 %v1998
        %v2138 = vpop.f32.mrf.mxu0
        %v2139 = vadd.f32 %v1961, %v2138
        %v2140 = vpop.f32.mrf.mxu0
        %v2141 = vpop.f32.mrf.mxu0
        %v2142 = vadd.f32 %v1961, %v2141
        %v2143 = vpop.f32.mrf.mxu0
        %2144 = vmatprep.mubr.bf16.mxu0 0
        %2145 = vmatmul.mubr.bf16.gmra.mxu0 %v2001
        %v2146 = vpop.f32.mrf.mxu0
        %v2147 = vadd.f32 %v1961, %v2146
        %v2148 = vpop.f32.mrf.mxu0
        %v2149 = vpop.f32.mrf.mxu0
        %v2150 = vadd.f32 %v1961, %v2149
        %v2151 = vpop.f32.mrf.mxu0
        %2152 = vmatprep.mubr.bf16.mxu0 0
        %2153 = vmatmul.mubr.bf16.gmra.mxu0 %v2004
        %v2154 = vpop.f32.mrf.mxu0
        %v2155 = vadd.f32 %v1961, %v2154
        %v2156 = vpop.f32.mrf.mxu0
        %v2157 = vpop.f32.mrf.mxu0
        %v2158 = vadd.f32 %v1961, %v2157
        %v2159 = vpop.f32.mrf.mxu0
        %2160 = vmatprep.mubr.bf16.mxu0 0
        %2161 = vmatmul.mubr.bf16.gmra.mxu0 %v2007
        %v2162 = vpop.f32.mrf.mxu0
        %v2163 = vadd.f32 %v1961, %v2162
        %v2164 = vpop.f32.mrf.mxu0
        %v2165 = vpop.f32.mrf.mxu0
        %v2166 = vadd.f32 %v1961, %v2165
        %v2167 = vpop.f32.mrf.mxu0
        %2168 = vmatprep.mubr.bf16.mxu0 0
        %2169 = vmatmul.mubr.bf16.gmra.mxu0 %v2010
        %v2170 = vpop.f32.mrf.mxu0
        %v2171 = vadd.f32 %v1961, %v2170
        %v2172 = vpop.f32.mrf.mxu0
        %v2173 = vpop.f32.mrf.mxu0
        %v2174 = vadd.f32 %v1961, %v2173
        %v2175 = vpop.f32.mrf.mxu0
        %2176 = vdwg.mxu0
        %v2177 = vmul.f32 %v2051, 0.01
        %v2178 = vmul.f32 %v2054, 0.01
        %v2179 = vmul.f32 %v2059, 0.01
        %v2180 = vmul.f32 %v2062, 0.01
        %v2181 = vmul.f32 %v2067, 0.01
        %v2182 = vmul.f32 %v2070, 0.01
        %v2183 = vmul.f32 %v2075, 0.01
        %v2184 = vmul.f32 %v2078, 0.01
        %v2185 = vmul.f32 %v2083, 0.01
        %v2186 = vmul.f32 %v2086, 0.01
        %v2187 = vmul.f32 %v2091, 0.01
        %v2188 = vmul.f32 %v2094, 0.01
        %v2189 = vmul.f32 %v2099, 0.01
        %v2190 = vmul.f32 %v2102, 0.01
        %v2191 = vmul.f32 %v2107, 0.01
        %v2192 = vmul.f32 %v2110, 0.01
        %v2193 = vmul.f32 %v2115, 0.01
        %v2194 = vmul.f32 %v2118, 0.01
        %v2195 = vmul.f32 %v2123, 0.01
        %v2196 = vmul.f32 %v2126, 0.01
        %v2197 = vmul.f32 %v2131, 0.01
        %v2198 = vmul.f32 %v2134, 0.01
        %v2199 = vmul.f32 %v2139, 0.01
        %v2200 = vmul.f32 %v2142, 0.01
        %v2201 = vmul.f32 %v2147, 0.01
        %v2202 = vmul.f32 %v2150, 0.01
        %v2203 = vmul.f32 %v2155, 0.01
        %v2204 = vmul.f32 %v2158, 0.01
        %v2205 = vmul.f32 %v2163, 0.01
        %v2206 = vmul.f32 %v2166, 0.01
        %v2207 = vmul.f32 %v2171, 0.01
        %v2208 = vmul.f32 %v2174, 0.01
        %v2209 = vmax.f32 %v2051, %v2177
        %v2210 = vmax.f32 %v2054, %v2178
        %v2211 = vmax.f32 %v2059, %v2179
        %v2212 = vmax.f32 %v2062, %v2180
        %v2213 = vmax.f32 %v2067, %v2181
        %v2214 = vmax.f32 %v2070, %v2182
        %v2215 = vmax.f32 %v2075, %v2183
        %v2216 = vmax.f32 %v2078, %v2184
        %v2217 = vmax.f32 %v2083, %v2185
        %v2218 = vmax.f32 %v2086, %v2186
        %v2219 = vmax.f32 %v2091, %v2187
        %v2220 = vmax.f32 %v2094, %v2188
        %v2221 = vmax.f32 %v2099, %v2189
        %v2222 = vmax.f32 %v2102, %v2190
        %v2223 = vmax.f32 %v2107, %v2191
        %v2224 = vmax.f32 %v2110, %v2192
        %v2225 = vmax.f32 %v2115, %v2193
        %v2226 = vmax.f32 %v2118, %v2194
        %v2227 = vmax.f32 %v2123, %v2195
        %v2228 = vmax.f32 %v2126, %v2196
        %v2229 = vmax.f32 %v2131, %v2197
        %v2230 = vmax.f32 %v2134, %v2198
        %v2231 = vmax.f32 %v2139, %v2199
        %v2232 = vmax.f32 %v2142, %v2200
        %v2233 = vmax.f32 %v2147, %v2201
        %v2234 = vmax.f32 %v2150, %v2202
        %v2235 = vmax.f32 %v2155, %v2203
        %v2236 = vmax.f32 %v2158, %v2204
        %v2237 = vmax.f32 %v2163, %v2205
        %v2238 = vmax.f32 %v2166, %v2206
        %v2239 = vmax.f32 %v2171, %v2207
        %v2240 = vmax.f32 %v2174, %v2208
        %v2241 = vpack.c.bf16 %v2210, %v2209
        %v2242 = vpack.c.bf16 %v2212, %v2211
        %v2243 = vpack.c.bf16 %v2214, %v2213
        %v2244 = vpack.c.bf16 %v2216, %v2215
        %v2245 = vpack.c.bf16 %v2218, %v2217
        %v2246 = vpack.c.bf16 %v2220, %v2219
        %v2247 = vpack.c.bf16 %v2222, %v2221
        %v2248 = vpack.c.bf16 %v2224, %v2223
        %v2249 = vpack.c.bf16 %v2226, %v2225
        %v2250 = vpack.c.bf16 %v2228, %v2227
        %v2251 = vpack.c.bf16 %v2230, %v2229
        %v2252 = vpack.c.bf16 %v2232, %v2231
        %v2253 = vpack.c.bf16 %v2234, %v2233
        %v2254 = vpack.c.bf16 %v2236, %v2235
        %v2255 = vpack.c.bf16 %v2238, %v2237
        %v2256 = vpack.c.bf16 %v2240, %v2239
        %v2257 = vld [vmem:[%s11] sm:$0xf]
        %v2258 = vld [vmem:[%s11 + $0x4] sm:$0xf]
        %v2259 = vld [vmem:[%s11 + $0x8] sm:$0xf]
        %v2260 = vld [vmem:[%s11 + $0xc] sm:$0xf]
        %v2261 = vld [vmem:[%s11 + $0x10] sm:$0xf]
        %v2262 = vld [vmem:[%s11 + $0x14] sm:$0xf]
        %v2263 = vld [vmem:[%s11 + $0x18] sm:$0xf]
        %v2264 = vld [vmem:[%s11 + $0x1c] sm:$0xf]
        %v2265 = vld [vmem:[%s12] sm:$0x1]
        %v2267 = vlaneseq
        %v2268 = vshrl.u32 %v2267, 7
        %v2269 = vsub.s32 0, %v2268
        %v2270 = vrot.slane %v2265, %v2269
        %v2280 = vunpack.c.l.b16 %v2257
        %v2281 = vunpack.c.l.b16 %v2258
        %v2282 = vunpack.c.l.b16 %v2259
        %v2283 = vunpack.c.l.b16 %v2260
        %v2284 = vunpack.c.l.b16 %v2261
        %v2285 = vunpack.c.l.b16 %v2262
        %v2286 = vunpack.c.l.b16 %v2263
        %v2287 = vunpack.c.l.b16 %v2264
        %v2288 = vpack.c.b16 %v2281, %v2280
        %v2289 = vpack.c.b16 %v2283, %v2282
        %v2290 = vpack.c.b16 %v2285, %v2284
        %v2291 = vpack.c.b16 %v2287, %v2286
        %v2297 = vsel %vm1073, %v2241, 0
        %v2300 = vsel %vm1073, %v2242, 0
        %v2303 = vsel %vm1073, %v2243, 0
        %v2306 = vsel %vm1073, %v2244, 0
        %v2309 = vsel %vm1073, %v2245, 0
        %v2312 = vsel %vm1073, %v2246, 0
        %v2315 = vsel %vm1073, %v2247, 0
        %v2318 = vsel %vm1073, %v2248, 0
        %v2321 = vsel %vm1073, %v2249, 0
        %v2324 = vsel %vm1073, %v2250, 0
        %v2327 = vsel %vm1073, %v2251, 0
        %v2330 = vsel %vm1073, %v2252, 0
        %v2333 = vsel %vm1073, %v2253, 0
        %v2336 = vsel %vm1073, %v2254, 0
        %v2339 = vsel %vm1073, %v2255, 0
        %v2342 = vsel %vm1073, %v2256, 0
        %2344 = vmatprep.subr.bf16.mxu0 0
        %2345 = vmatpush1.bf16.msra.mxu0 0
        %2346 = vmatprep.subr.bf16.mxu0 0
        %2347 = vmatpush1.bf16.msra.mxu0 0
        %2348 = vmatprep.subr.bf16.mxu0 0
        %2349 = vmatpush1.bf16.msra.mxu0 0
        %2350 = vmatprep.subr.bf16.mxu0 0
        %2351 = vmatpush1.bf16.msra.mxu0 0
        %2352 = vmatprep.subr.bf16.mxu0 0
        %2353 = vmatpush1.bf16.msra.mxu0 %v2291
        %2354 = vmatprep.subr.bf16.mxu0 0
        %2355 = vmatpush1.bf16.msra.mxu0 %v2290
        %2356 = vmatprep.subr.bf16.mxu0 0
        %2357 = vmatpush1.bf16.msra.mxu0 %v2289
        %2358 = vmatprep.subr.bf16.mxu0 0
        %2359 = vmatpush1.bf16.msra.mxu0 %v2288
        %2360 = vmatprep.subr.bf16.mxu0 0
        %2361 = vmatpush2.bf16.msra.mxu0 0
        %2362 = vmatprep.subr.bf16.mxu0 0
        %2363 = vmatpush2.bf16.msra.mxu0 0
        %2364 = vmatprep.subr.bf16.mxu0 0
        %2365 = vmatpush2.bf16.msra.mxu0 0
        %2366 = vmatprep.subr.bf16.mxu0 0
        %2367 = vmatpush2.bf16.msra.mxu0 0
        %2368 = vmatprep.subr.bf16.mxu0 0
        %2369 = vmatpush2.bf16.msra.mxu0 0
        %2370 = vmatprep.subr.bf16.mxu0 0
        %2371 = vmatpush2.bf16.msra.mxu0 0
        %2372 = vmatprep.subr.bf16.mxu0 0
        %2373 = vmatpush2.bf16.msra.mxu0 0
        %2374 = vmatprep.subr.bf16.mxu0 0
        %2375 = vmatpush2.bf16.msra.mxu0 0
        %2376 = vmatprep.mubr.bf16.mxu0 0
        %2377 = vmatmul.mubr.bf16.gmra.mxu0 %v2297
        %v2378 = vpop.f32.mrf.mxu0
        %v2379 = vadd.f32 %v2270, %v2378
        %v2380 = vpop.f32.mrf.mxu0
        %v2381 = vpop.f32.mrf.mxu0
        %v2382 = vadd.f32 %v2270, %v2381
        %v2383 = vpop.f32.mrf.mxu0
        %2384 = vmatprep.mubr.bf16.mxu0 0
        %2385 = vmatmul.mubr.bf16.gmra.mxu0 %v2300
        %v2386 = vpop.f32.mrf.mxu0
        %v2387 = vadd.f32 %v2270, %v2386
        %v2388 = vpop.f32.mrf.mxu0
        %v2389 = vpop.f32.mrf.mxu0
        %v2390 = vadd.f32 %v2270, %v2389
        %v2391 = vpop.f32.mrf.mxu0
        %2392 = vmatprep.mubr.bf16.mxu0 0
        %2393 = vmatmul.mubr.bf16.gmra.mxu0 %v2303
        %v2394 = vpop.f32.mrf.mxu0
        %v2395 = vadd.f32 %v2270, %v2394
        %v2396 = vpop.f32.mrf.mxu0
        %v2397 = vpop.f32.mrf.mxu0
        %v2398 = vadd.f32 %v2270, %v2397
        %v2399 = vpop.f32.mrf.mxu0
        %2400 = vmatprep.mubr.bf16.mxu0 0
        %2401 = vmatmul.mubr.bf16.gmra.mxu0 %v2306
        %v2402 = vpop.f32.mrf.mxu0
        %v2403 = vadd.f32 %v2270, %v2402
        %v2404 = vpop.f32.mrf.mxu0
        %v2405 = vpop.f32.mrf.mxu0
        %v2406 = vadd.f32 %v2270, %v2405
        %v2407 = vpop.f32.mrf.mxu0
        %2408 = vmatprep.mubr.bf16.mxu0 0
        %2409 = vmatmul.mubr.bf16.gmra.mxu0 %v2309
        %v2410 = vpop.f32.mrf.mxu0
        %v2411 = vadd.f32 %v2270, %v2410
        %v2412 = vpop.f32.mrf.mxu0
        %v2413 = vpop.f32.mrf.mxu0
        %v2414 = vadd.f32 %v2270, %v2413
        %v2415 = vpop.f32.mrf.mxu0
        %2416 = vmatprep.mubr.bf16.mxu0 0
        %2417 = vmatmul.mubr.bf16.gmra.mxu0 %v2312
        %v2418 = vpop.f32.mrf.mxu0
        %v2419 = vadd.f32 %v2270, %v2418
        %v2420 = vpop.f32.mrf.mxu0
        %v2421 = vpop.f32.mrf.mxu0
        %v2422 = vadd.f32 %v2270, %v2421
        %v2423 = vpop.f32.mrf.mxu0
        %2424 = vmatprep.mubr.bf16.mxu0 0
        %2425 = vmatmul.mubr.bf16.gmra.mxu0 %v2315
        %v2426 = vpop.f32.mrf.mxu0
        %v2427 = vadd.f32 %v2270, %v2426
        %v2428 = vpop.f32.mrf.mxu0
        %v2429 = vpop.f32.mrf.mxu0
        %v2430 = vadd.f32 %v2270, %v2429
        %v2431 = vpop.f32.mrf.mxu0
        %2432 = vmatprep.mubr.bf16.mxu0 0
        %2433 = vmatmul.mubr.bf16.gmra.mxu0 %v2318
        %v2434 = vpop.f32.mrf.mxu0
        %v2435 = vadd.f32 %v2270, %v2434
        %v2436 = vpop.f32.mrf.mxu0
        %v2437 = vpop.f32.mrf.mxu0
        %v2438 = vadd.f32 %v2270, %v2437
        %v2439 = vpop.f32.mrf.mxu0
        %2440 = vmatprep.mubr.bf16.mxu0 0
        %2441 = vmatmul.mubr.bf16.gmra.mxu0 %v2321
        %v2442 = vpop.f32.mrf.mxu0
        %v2443 = vadd.f32 %v2270, %v2442
        %v2444 = vpop.f32.mrf.mxu0
        %v2445 = vpop.f32.mrf.mxu0
        %v2446 = vadd.f32 %v2270, %v2445
        %v2447 = vpop.f32.mrf.mxu0
        %2448 = vmatprep.mubr.bf16.mxu0 0
        %2449 = vmatmul.mubr.bf16.gmra.mxu0 %v2324
        %v2450 = vpop.f32.mrf.mxu0
        %v2451 = vadd.f32 %v2270, %v2450
        %v2452 = vpop.f32.mrf.mxu0
        %v2453 = vpop.f32.mrf.mxu0
        %v2454 = vadd.f32 %v2270, %v2453
        %v2455 = vpop.f32.mrf.mxu0
        %2456 = vmatprep.mubr.bf16.mxu0 0
        %2457 = vmatmul.mubr.bf16.gmra.mxu0 %v2327
        %v2458 = vpop.f32.mrf.mxu0
        %v2459 = vadd.f32 %v2270, %v2458
        %v2460 = vpop.f32.mrf.mxu0
        %v2461 = vpop.f32.mrf.mxu0
        %v2462 = vadd.f32 %v2270, %v2461
        %v2463 = vpop.f32.mrf.mxu0
        %2464 = vmatprep.mubr.bf16.mxu0 0
        %2465 = vmatmul.mubr.bf16.gmra.mxu0 %v2330
        %v2466 = vpop.f32.mrf.mxu0
        %v2467 = vadd.f32 %v2270, %v2466
        %v2468 = vpop.f32.mrf.mxu0
        %v2469 = vpop.f32.mrf.mxu0
        %v2470 = vadd.f32 %v2270, %v2469
        %v2471 = vpop.f32.mrf.mxu0
        %2472 = vmatprep.mubr.bf16.mxu0 0
        %2473 = vmatmul.mubr.bf16.gmra.mxu0 %v2333
        %v2474 = vpop.f32.mrf.mxu0
        %v2475 = vadd.f32 %v2270, %v2474
        %v2476 = vpop.f32.mrf.mxu0
        %v2477 = vpop.f32.mrf.mxu0
        %v2478 = vadd.f32 %v2270, %v2477
        %v2479 = vpop.f32.mrf.mxu0
        %2480 = vmatprep.mubr.bf16.mxu0 0
        %2481 = vmatmul.mubr.bf16.gmra.mxu0 %v2336
        %v2482 = vpop.f32.mrf.mxu0
        %v2483 = vadd.f32 %v2270, %v2482
        %v2484 = vpop.f32.mrf.mxu0
        %v2485 = vpop.f32.mrf.mxu0
        %v2486 = vadd.f32 %v2270, %v2485
        %v2487 = vpop.f32.mrf.mxu0
        %2488 = vmatprep.mubr.bf16.mxu0 0
        %2489 = vmatmul.mubr.bf16.gmra.mxu0 %v2339
        %v2490 = vpop.f32.mrf.mxu0
        %v2491 = vadd.f32 %v2270, %v2490
        %v2492 = vpop.f32.mrf.mxu0
        %v2493 = vpop.f32.mrf.mxu0
        %v2494 = vadd.f32 %v2270, %v2493
        %v2495 = vpop.f32.mrf.mxu0
        %2496 = vmatprep.mubr.bf16.mxu0 0
        %2497 = vmatmul.mubr.bf16.gmra.mxu0 %v2342
        %v2498 = vpop.f32.mrf.mxu0
        %v2499 = vadd.f32 %v2270, %v2498
        %v2500 = vpop.f32.mrf.mxu0
        %v2501 = vpop.f32.mrf.mxu0
        %v2502 = vadd.f32 %v2270, %v2501
        %v2503 = vpop.f32.mrf.mxu0
        %2504 = vdwg.mxu0
        %v2505 = vmul.f32 %v2379, 0.01
        %v2506 = vmul.f32 %v2382, 0.01
        %v2507 = vmul.f32 %v2387, 0.01
        %v2508 = vmul.f32 %v2390, 0.01
        %v2509 = vmul.f32 %v2395, 0.01
        %v2510 = vmul.f32 %v2398, 0.01
        %v2511 = vmul.f32 %v2403, 0.01
        %v2512 = vmul.f32 %v2406, 0.01
        %v2513 = vmul.f32 %v2411, 0.01
        %v2514 = vmul.f32 %v2414, 0.01
        %v2515 = vmul.f32 %v2419, 0.01
        %v2516 = vmul.f32 %v2422, 0.01
        %v2517 = vmul.f32 %v2427, 0.01
        %v2518 = vmul.f32 %v2430, 0.01
        %v2519 = vmul.f32 %v2435, 0.01
        %v2520 = vmul.f32 %v2438, 0.01
        %v2521 = vmul.f32 %v2443, 0.01
        %v2522 = vmul.f32 %v2446, 0.01
        %v2523 = vmul.f32 %v2451, 0.01
        %v2524 = vmul.f32 %v2454, 0.01
        %v2525 = vmul.f32 %v2459, 0.01
        %v2526 = vmul.f32 %v2462, 0.01
        %v2527 = vmul.f32 %v2467, 0.01
        %v2528 = vmul.f32 %v2470, 0.01
        %v2529 = vmul.f32 %v2475, 0.01
        %v2530 = vmul.f32 %v2478, 0.01
        %v2531 = vmul.f32 %v2483, 0.01
        %v2532 = vmul.f32 %v2486, 0.01
        %v2533 = vmul.f32 %v2491, 0.01
        %v2534 = vmul.f32 %v2494, 0.01
        %v2535 = vmul.f32 %v2499, 0.01
        %v2536 = vmul.f32 %v2502, 0.01
        %v2537 = vmax.f32 %v2379, %v2505
        %v2538 = vmax.f32 %v2382, %v2506
        %v2539 = vmax.f32 %v2387, %v2507
        %v2540 = vmax.f32 %v2390, %v2508
        %v2541 = vmax.f32 %v2395, %v2509
        %v2542 = vmax.f32 %v2398, %v2510
        %v2543 = vmax.f32 %v2403, %v2511
        %v2544 = vmax.f32 %v2406, %v2512
        %v2545 = vmax.f32 %v2411, %v2513
        %v2546 = vmax.f32 %v2414, %v2514
        %v2547 = vmax.f32 %v2419, %v2515
        %v2548 = vmax.f32 %v2422, %v2516
        %v2549 = vmax.f32 %v2427, %v2517
        %v2550 = vmax.f32 %v2430, %v2518
        %v2551 = vmax.f32 %v2435, %v2519
        %v2552 = vmax.f32 %v2438, %v2520
        %v2553 = vmax.f32 %v2443, %v2521
        %v2554 = vmax.f32 %v2446, %v2522
        %v2555 = vmax.f32 %v2451, %v2523
        %v2556 = vmax.f32 %v2454, %v2524
        %v2557 = vmax.f32 %v2459, %v2525
        %v2558 = vmax.f32 %v2462, %v2526
        %v2559 = vmax.f32 %v2467, %v2527
        %v2560 = vmax.f32 %v2470, %v2528
        %v2561 = vmax.f32 %v2475, %v2529
        %v2562 = vmax.f32 %v2478, %v2530
        %v2563 = vmax.f32 %v2483, %v2531
        %v2564 = vmax.f32 %v2486, %v2532
        %v2565 = vmax.f32 %v2491, %v2533
        %v2566 = vmax.f32 %v2494, %v2534
        %v2567 = vmax.f32 %v2499, %v2535
        %v2568 = vmax.f32 %v2502, %v2536
        %v2569 = vpack.c.bf16 %v2538, %v2537
        %v2570 = vpack.c.bf16 %v2540, %v2539
        %v2571 = vpack.c.bf16 %v2542, %v2541
        %v2572 = vpack.c.bf16 %v2544, %v2543
        %v2573 = vpack.c.bf16 %v2546, %v2545
        %v2574 = vpack.c.bf16 %v2548, %v2547
        %v2575 = vpack.c.bf16 %v2550, %v2549
        %v2576 = vpack.c.bf16 %v2552, %v2551
        %v2577 = vpack.c.bf16 %v2554, %v2553
        %v2578 = vpack.c.bf16 %v2556, %v2555
        %v2579 = vpack.c.bf16 %v2558, %v2557
        %v2580 = vpack.c.bf16 %v2560, %v2559
        %v2581 = vpack.c.bf16 %v2562, %v2561
        %v2582 = vpack.c.bf16 %v2564, %v2563
        %v2583 = vpack.c.bf16 %v2566, %v2565
        %v2584 = vpack.c.bf16 %v2568, %v2567
        %v2585 = vld [vmem:[%s13] sm:$0xf]
        %v2586 = vld [vmem:[%s13 + $0x4] sm:$0xf]
        %v2587 = vld [vmem:[%s13 + $0x8] sm:$0xf]
        %v2588 = vld [vmem:[%s13 + $0xc] sm:$0xf]
        %v2589 = vld [vmem:[%s13 + $0x10] sm:$0xf]
        %v2590 = vld [vmem:[%s13 + $0x14] sm:$0xf]
        %v2591 = vld [vmem:[%s13 + $0x18] sm:$0xf]
        %v2592 = vld [vmem:[%s13 + $0x1c] sm:$0xf]
        %v2593 = vld [vmem:[#allocation2] sm:$0x1]
        %v2595 = vlaneseq
        %v2596 = vshrl.u32 %v2595, 7
        %v2597 = vsub.s32 0, %v2596
        %v2598 = vrot.slane %v2593, %v2597
        %v2608 = vunpack.c.l.b16 %v2585
        %v2609 = vunpack.c.l.b16 %v2586
        %v2610 = vunpack.c.l.b16 %v2587
        %v2611 = vunpack.c.l.b16 %v2588
        %v2612 = vunpack.c.l.b16 %v2589
        %v2613 = vunpack.c.l.b16 %v2590
        %v2614 = vunpack.c.l.b16 %v2591
        %v2615 = vunpack.c.l.b16 %v2592
        %v2616 = vpack.c.b16 %v2609, %v2608
        %v2617 = vpack.c.b16 %v2611, %v2610
        %v2618 = vpack.c.b16 %v2613, %v2612
        %v2619 = vpack.c.b16 %v2615, %v2614
        %v2625 = vsel %vm1073, %v2569, 0
        %v2628 = vsel %vm1073, %v2570, 0
        %v2631 = vsel %vm1073, %v2571, 0
        %v2634 = vsel %vm1073, %v2572, 0
        %v2637 = vsel %vm1073, %v2573, 0
        %v2640 = vsel %vm1073, %v2574, 0
        %v2643 = vsel %vm1073, %v2575, 0
        %v2646 = vsel %vm1073, %v2576, 0
        %v2649 = vsel %vm1073, %v2577, 0
        %v2652 = vsel %vm1073, %v2578, 0
        %v2655 = vsel %vm1073, %v2579, 0
        %v2658 = vsel %vm1073, %v2580, 0
        %v2661 = vsel %vm1073, %v2581, 0
        %v2664 = vsel %vm1073, %v2582, 0
        %v2667 = vsel %vm1073, %v2583, 0
        %v2670 = vsel %vm1073, %v2584, 0
        %2672 = vmatprep.subr.bf16.mxu0 0
        %2673 = vmatpush1.bf16.msra.mxu0 0
        %2674 = vmatprep.subr.bf16.mxu0 0
        %2675 = vmatpush1.bf16.msra.mxu0 0
        %2676 = vmatprep.subr.bf16.mxu0 0
        %2677 = vmatpush1.bf16.msra.mxu0 0
        %2678 = vmatprep.subr.bf16.mxu0 0
        %2679 = vmatpush1.bf16.msra.mxu0 0
        %2680 = vmatprep.subr.bf16.mxu0 0
        %2681 = vmatpush1.bf16.msra.mxu0 %v2619
        %2682 = vmatprep.subr.bf16.mxu0 0
        %2683 = vmatpush1.bf16.msra.mxu0 %v2618
        %2684 = vmatprep.subr.bf16.mxu0 0
        %2685 = vmatpush1.bf16.msra.mxu0 %v2617
        %2686 = vmatprep.subr.bf16.mxu0 0
        %2687 = vmatpush1.bf16.msra.mxu0 %v2616
        %2688 = vmatprep.subr.bf16.mxu0 0
        %2689 = vmatpush2.bf16.msra.mxu0 0
        %2690 = vmatprep.subr.bf16.mxu0 0
        %2691 = vmatpush2.bf16.msra.mxu0 0
        %2692 = vmatprep.subr.bf16.mxu0 0
        %2693 = vmatpush2.bf16.msra.mxu0 0
        %2694 = vmatprep.subr.bf16.mxu0 0
        %2695 = vmatpush2.bf16.msra.mxu0 0
        %2696 = vmatprep.subr.bf16.mxu0 0
        %2697 = vmatpush2.bf16.msra.mxu0 0
        %2698 = vmatprep.subr.bf16.mxu0 0
        %2699 = vmatpush2.bf16.msra.mxu0 0
        %2700 = vmatprep.subr.bf16.mxu0 0
        %2701 = vmatpush2.bf16.msra.mxu0 0
        %2702 = vmatprep.subr.bf16.mxu0 0
        %2703 = vmatpush2.bf16.msra.mxu0 0
        %2704 = vmatprep.mubr.bf16.mxu0 0
        %2705 = vmatmul.mubr.bf16.gmra.mxu0 %v2625
        %v2706 = vpop.f32.mrf.mxu0
        %v2707 = vadd.f32 %v2598, %v2706
        %v2708 = vpop.f32.mrf.mxu0
        %v2709 = vpop.f32.mrf.mxu0
        %v2710 = vadd.f32 %v2598, %v2709
        %v2711 = vpop.f32.mrf.mxu0
        %2712 = vmatprep.mubr.bf16.mxu0 0
        %2713 = vmatmul.mubr.bf16.gmra.mxu0 %v2628
        %v2714 = vpop.f32.mrf.mxu0
        %v2715 = vadd.f32 %v2598, %v2714
        %v2716 = vpop.f32.mrf.mxu0
        %v2717 = vpop.f32.mrf.mxu0
        %v2718 = vadd.f32 %v2598, %v2717
        %v2719 = vpop.f32.mrf.mxu0
        %2720 = vmatprep.mubr.bf16.mxu0 0
        %2721 = vmatmul.mubr.bf16.gmra.mxu0 %v2631
        %v2722 = vpop.f32.mrf.mxu0
        %v2723 = vadd.f32 %v2598, %v2722
        %v2724 = vpop.f32.mrf.mxu0
        %v2725 = vpop.f32.mrf.mxu0
        %v2726 = vadd.f32 %v2598, %v2725
        %v2727 = vpop.f32.mrf.mxu0
        %2728 = vmatprep.mubr.bf16.mxu0 0
        %2729 = vmatmul.mubr.bf16.gmra.mxu0 %v2634
        %v2730 = vpop.f32.mrf.mxu0
        %v2731 = vadd.f32 %v2598, %v2730
        %v2732 = vpop.f32.mrf.mxu0
        %v2733 = vpop.f32.mrf.mxu0
        %v2734 = vadd.f32 %v2598, %v2733
        %v2735 = vpop.f32.mrf.mxu0
        %2736 = vmatprep.mubr.bf16.mxu0 0
        %2737 = vmatmul.mubr.bf16.gmra.mxu0 %v2637
        %v2738 = vpop.f32.mrf.mxu0
        %v2739 = vadd.f32 %v2598, %v2738
        %v2740 = vpop.f32.mrf.mxu0
        %v2741 = vpop.f32.mrf.mxu0
        %v2742 = vadd.f32 %v2598, %v2741
        %v2743 = vpop.f32.mrf.mxu0
        %2744 = vmatprep.mubr.bf16.mxu0 0
        %2745 = vmatmul.mubr.bf16.gmra.mxu0 %v2640
        %v2746 = vpop.f32.mrf.mxu0
        %v2747 = vadd.f32 %v2598, %v2746
        %v2748 = vpop.f32.mrf.mxu0
        %v2749 = vpop.f32.mrf.mxu0
        %v2750 = vadd.f32 %v2598, %v2749
        %v2751 = vpop.f32.mrf.mxu0
        %2752 = vmatprep.mubr.bf16.mxu0 0
        %2753 = vmatmul.mubr.bf16.gmra.mxu0 %v2643
        %v2754 = vpop.f32.mrf.mxu0
        %v2755 = vadd.f32 %v2598, %v2754
        %v2756 = vpop.f32.mrf.mxu0
        %v2757 = vpop.f32.mrf.mxu0
        %v2758 = vadd.f32 %v2598, %v2757
        %v2759 = vpop.f32.mrf.mxu0
        %2760 = vmatprep.mubr.bf16.mxu0 0
        %2761 = vmatmul.mubr.bf16.gmra.mxu0 %v2646
        %v2762 = vpop.f32.mrf.mxu0
        %v2763 = vadd.f32 %v2598, %v2762
        %v2764 = vpop.f32.mrf.mxu0
        %v2765 = vpop.f32.mrf.mxu0
        %v2766 = vadd.f32 %v2598, %v2765
        %v2767 = vpop.f32.mrf.mxu0
        %2768 = vmatprep.mubr.bf16.mxu0 0
        %2769 = vmatmul.mubr.bf16.gmra.mxu0 %v2649
        %v2770 = vpop.f32.mrf.mxu0
        %v2771 = vadd.f32 %v2598, %v2770
        %v2772 = vpop.f32.mrf.mxu0
        %v2773 = vpop.f32.mrf.mxu0
        %v2774 = vadd.f32 %v2598, %v2773
        %v2775 = vpop.f32.mrf.mxu0
        %2776 = vmatprep.mubr.bf16.mxu0 0
        %2777 = vmatmul.mubr.bf16.gmra.mxu0 %v2652
        %v2778 = vpop.f32.mrf.mxu0
        %v2779 = vadd.f32 %v2598, %v2778
        %v2780 = vpop.f32.mrf.mxu0
        %v2781 = vpop.f32.mrf.mxu0
        %v2782 = vadd.f32 %v2598, %v2781
        %v2783 = vpop.f32.mrf.mxu0
        %2784 = vmatprep.mubr.bf16.mxu0 0
        %2785 = vmatmul.mubr.bf16.gmra.mxu0 %v2655
        %v2786 = vpop.f32.mrf.mxu0
        %v2787 = vadd.f32 %v2598, %v2786
        %v2788 = vpop.f32.mrf.mxu0
        %v2789 = vpop.f32.mrf.mxu0
        %v2790 = vadd.f32 %v2598, %v2789
        %v2791 = vpop.f32.mrf.mxu0
        %2792 = vmatprep.mubr.bf16.mxu0 0
        %2793 = vmatmul.mubr.bf16.gmra.mxu0 %v2658
        %v2794 = vpop.f32.mrf.mxu0
        %v2795 = vadd.f32 %v2598, %v2794
        %v2796 = vpop.f32.mrf.mxu0
        %v2797 = vpop.f32.mrf.mxu0
        %v2798 = vadd.f32 %v2598, %v2797
        %v2799 = vpop.f32.mrf.mxu0
        %2800 = vmatprep.mubr.bf16.mxu0 0
        %2801 = vmatmul.mubr.bf16.gmra.mxu0 %v2661
        %v2802 = vpop.f32.mrf.mxu0
        %v2803 = vadd.f32 %v2598, %v2802
        %v2804 = vpop.f32.mrf.mxu0
        %v2805 = vpop.f32.mrf.mxu0
        %v2806 = vadd.f32 %v2598, %v2805
        %v2807 = vpop.f32.mrf.mxu0
        %2808 = vmatprep.mubr.bf16.mxu0 0
        %2809 = vmatmul.mubr.bf16.gmra.mxu0 %v2664
        %v2810 = vpop.f32.mrf.mxu0
        %v2811 = vadd.f32 %v2598, %v2810
        %v2812 = vpop.f32.mrf.mxu0
        %v2813 = vpop.f32.mrf.mxu0
        %v2814 = vadd.f32 %v2598, %v2813
        %v2815 = vpop.f32.mrf.mxu0
        %2816 = vmatprep.mubr.bf16.mxu0 0
        %2817 = vmatmul.mubr.bf16.gmra.mxu0 %v2667
        %v2818 = vpop.f32.mrf.mxu0
        %v2819 = vadd.f32 %v2598, %v2818
        %v2820 = vpop.f32.mrf.mxu0
        %v2821 = vpop.f32.mrf.mxu0
        %v2822 = vadd.f32 %v2598, %v2821
        %v2823 = vpop.f32.mrf.mxu0
        %2824 = vmatprep.mubr.bf16.mxu0 0
        %2825 = vmatmul.mubr.bf16.gmra.mxu0 %v2670
        %v2826 = vpop.f32.mrf.mxu0
        %v2827 = vadd.f32 %v2598, %v2826
        %v2828 = vpop.f32.mrf.mxu0
        %v2829 = vpop.f32.mrf.mxu0
        %v2830 = vadd.f32 %v2598, %v2829
        %v2831 = vpop.f32.mrf.mxu0
        %2832 = vdwg.mxu0
        %2833 = vst.msk [vmem:[%s553] sm:$0xff] %vm1963, %v1813
        %2834 = vst.msk [vmem:[%s553 + $0x8] sm:$0xff] %vm1963, %v1816
        %2835 = vst.msk [vmem:[%s553 + $0x10] sm:$0xff] %vm1963, %v1821
        %2836 = vst.msk [vmem:[%s553 + $0x18] sm:$0xff] %vm1963, %v1824
        %2837 = vst.msk [vmem:[%s553 + $0x20] sm:$0xff] %vm1963, %v1829
        %2838 = vst.msk [vmem:[%s553 + $0x28] sm:$0xff] %vm1963, %v1832
        %2839 = vst.msk [vmem:[%s553 + $0x30] sm:$0xff] %vm1963, %v1837
        %2840 = vst.msk [vmem:[%s553 + $0x38] sm:$0xff] %vm1963, %v1840
        %2841 = vst.msk [vmem:[%s553 + $0x40] sm:$0xff] %vm1963, %v1845
        %2842 = vst.msk [vmem:[%s553 + $0x48] sm:$0xff] %vm1963, %v1848
        %2843 = vst.msk [vmem:[%s553 + $0x50] sm:$0xff] %vm1963, %v1853
        %2844 = vst.msk [vmem:[%s553 + $0x58] sm:$0xff] %vm1963, %v1856
        %2845 = vst.msk [vmem:[%s553 + $0x60] sm:$0xff] %vm1963, %v1861
        %2846 = vst.msk [vmem:[%s553 + $0x68] sm:$0xff] %vm1963, %v1864
        %2847 = vst.msk [vmem:[%s553 + $0x70] sm:$0xff] %vm1963, %v1869
        %2848 = vst.msk [vmem:[%s553 + $0x78] sm:$0xff] %vm1963, %v1872
        %2849 = vst.msk [vmem:[%s553 + $0x80] sm:$0xff] %vm1963, %v1877
        %2850 = vst.msk [vmem:[%s553 + $0x88] sm:$0xff] %vm1963, %v1880
        %2851 = vst.msk [vmem:[%s553 + $0x90] sm:$0xff] %vm1963, %v1885
        %2852 = vst.msk [vmem:[%s553 + $0x98] sm:$0xff] %vm1963, %v1888
        %2853 = vst.msk [vmem:[%s553 + $0xa0] sm:$0xff] %vm1963, %v1893
        %2854 = vst.msk [vmem:[%s553 + $0xa8] sm:$0xff] %vm1963, %v1896
        %2855 = vst.msk [vmem:[%s553 + $0xb0] sm:$0xff] %vm1963, %v1901
        %2856 = vst.msk [vmem:[%s553 + $0xb8] sm:$0xff] %vm1963, %v1904
        %2857 = vst.msk [vmem:[%s553 + $0xc0] sm:$0xff] %vm1963, %v1909
        %2858 = vst.msk [vmem:[%s553 + $0xc8] sm:$0xff] %vm1963, %v1912
        %2859 = vst.msk [vmem:[%s553 + $0xd0] sm:$0xff] %vm1963, %v1917
        %2860 = vst.msk [vmem:[%s553 + $0xd8] sm:$0xff] %vm1963, %v1920
        %2861 = vst.msk [vmem:[%s553 + $0xe0] sm:$0xff] %vm1963, %v1925
        %2862 = vst.msk [vmem:[%s553 + $0xe8] sm:$0xff] %vm1963, %v1928
        %2863 = vst.msk [vmem:[%s553 + $0xf0] sm:$0xff] %vm1963, %v1933
        %2864 = vst.msk [vmem:[%s553 + $0xf8] sm:$0xff] %vm1963, %v1936
        %vm2865 = vcmask 7168
        %2866 = vst.msk [vmem:[%s559] sm:$0xff] %vm2865, %v2707
        %2867 = vst.msk [vmem:[%s559 + $0x8] sm:$0xff] %vm2865, %v2710
        %2868 = vst.msk [vmem:[%s559 + $0x10] sm:$0xff] %vm2865, %v2715
        %2869 = vst.msk [vmem:[%s559 + $0x18] sm:$0xff] %vm2865, %v2718
        %2870 = vst.msk [vmem:[%s559 + $0x20] sm:$0xff] %vm2865, %v2723
        %2871 = vst.msk [vmem:[%s559 + $0x28] sm:$0xff] %vm2865, %v2726
        %2872 = vst.msk [vmem:[%s559 + $0x30] sm:$0xff] %vm2865, %v2731
        %2873 = vst.msk [vmem:[%s559 + $0x38] sm:$0xff] %vm2865, %v2734
        %2874 = vst.msk [vmem:[%s559 + $0x40] sm:$0xff] %vm2865, %v2739
        %2875 = vst.msk [vmem:[%s559 + $0x48] sm:$0xff] %vm2865, %v2742
        %2876 = vst.msk [vmem:[%s559 + $0x50] sm:$0xff] %vm2865, %v2747
        %2877 = vst.msk [vmem:[%s559 + $0x58] sm:$0xff] %vm2865, %v2750
        %2878 = vst.msk [vmem:[%s559 + $0x60] sm:$0xff] %vm2865, %v2755
        %2879 = vst.msk [vmem:[%s559 + $0x68] sm:$0xff] %vm2865, %v2758
        %2880 = vst.msk [vmem:[%s559 + $0x70] sm:$0xff] %vm2865, %v2763
        %2881 = vst.msk [vmem:[%s559 + $0x78] sm:$0xff] %vm2865, %v2766
        %2882 = vst.msk [vmem:[%s559 + $0x80] sm:$0xff] %vm2865, %v2771
        %2883 = vst.msk [vmem:[%s559 + $0x88] sm:$0xff] %vm2865, %v2774
        %2884 = vst.msk [vmem:[%s559 + $0x90] sm:$0xff] %vm2865, %v2779
        %2885 = vst.msk [vmem:[%s559 + $0x98] sm:$0xff] %vm2865, %v2782
        %2886 = vst.msk [vmem:[%s559 + $0xa0] sm:$0xff] %vm2865, %v2787
        %2887 = vst.msk [vmem:[%s559 + $0xa8] sm:$0xff] %vm2865, %v2790
        %2888 = vst.msk [vmem:[%s559 + $0xb0] sm:$0xff] %vm2865, %v2795
        %2889 = vst.msk [vmem:[%s559 + $0xb8] sm:$0xff] %vm2865, %v2798
        %2890 = vst.msk [vmem:[%s559 + $0xc0] sm:$0xff] %vm2865, %v2803
        %2891 = vst.msk [vmem:[%s559 + $0xc8] sm:$0xff] %vm2865, %v2806
        %2892 = vst.msk [vmem:[%s559 + $0xd0] sm:$0xff] %vm2865, %v2811
        %2893 = vst.msk [vmem:[%s559 + $0xd8] sm:$0xff] %vm2865, %v2814
        %2894 = vst.msk [vmem:[%s559 + $0xe0] sm:$0xff] %vm2865, %v2819
        %2895 = vst.msk [vmem:[%s559 + $0xe8] sm:$0xff] %vm2865, %v2822
        %2896 = vst.msk [vmem:[%s559 + $0xf0] sm:$0xff] %vm2865, %v2827
        %2897 = vst.msk [vmem:[%s559 + $0xf8] sm:$0xff] %vm2865, %v2830
        %s2898 = smul.u32 32, %s33
        %p2899 = scmp.lt.s32.totalorder %s2898, 63
        %s2900 = scalar_select %p2899, %s2898, 63
        %s2901 = smul.addr %s2900, 8
        %s2902 = scalar_lea.vmem %s15, %s2901
        %s2903 = smul.u32 32, %s33
        %p2904 = scmp.lt.s32.totalorder %s2903, 63
        %s2905 = scalar_select %p2904, %s2903, 63
        %s2906 = smul.addr %s2905, 8
        %s2907 = scalar_lea.vmem %s16, %s2906
        // Predicated region
        $region85: #{tpu_custom_call.1} parent=79 // pred_check
          %p2908 = pneg %p371
        $region86: #{tpu_custom_call.1} parent=79 // pred_check_branch
          %2910 = sbr.rel (%p2908) target = $region88
        $region87: #{tpu_custom_call.1} parent=79 // pred_region
          %s2911 = smul.u32 32, %s33
        $region88: #{tpu_custom_call.1} parent=79 // pred_fallthru
          _
        // Predicated region
        $region89: #{tpu_custom_call.1} parent=79 // pred_check
          %p2912 = pneg %p397
        $region90: #{tpu_custom_call.1} parent=79 // pred_check_branch
          %2914 = sbr.rel (%p2912) target = $region92
        $region91: #{tpu_custom_call.1} parent=79 // pred_region
          %s2915 = smul.u32 32, %s33
        $region92: #{tpu_custom_call.1} parent=79 // pred_fallthru
          _
      $region80: #{tpu_custom_call.1} parent=5 // pred_fallthru
        _
      %p2916 = scmp.le.s32.totalorder 2, %s28
      // Predicated region
      $region93: #{tpu_custom_call.1} parent=5 // pred_check
        %p2917 = pneg %p2916
      $region94: #{tpu_custom_call.1} parent=5 // pred_check_branch
        %2919 = sbr.rel (%p2917) target = $region96
      $region95: #{tpu_custom_call.1} parent=5 // pred_region
        %s2920 = ssub.s32 %s28, 2
        // Predicated region
        $region97: #{tpu_custom_call.1} parent=95 // pred_check
          %p2921 = pneg %p377
        $region98: #{tpu_custom_call.1} parent=95 // pred_check_branch
          %2923 = sbr.rel (%p2921) target = $region100
        $region99: #{tpu_custom_call.1} parent=95 // pred_region
          %s2924 = smul.u32 32, %s34
          %p2925 = scmp.lt.s32.totalorder %s2924, 63
          %s2926 = scalar_select %p2925, %s2924, 63
          %s2927 = smul.addr %s2926, 8
          %s2928 = scalar_lea.vmem %s15, %s2927
        $region100: #{tpu_custom_call.1} parent=95 // pred_fallthru
          _
        // Predicated region
        $region101: #{tpu_custom_call.1} parent=95 // pred_check
          %p2929 = pneg %p403
        $region102: #{tpu_custom_call.1} parent=95 // pred_check_branch
          %2931 = sbr.rel (%p2929) target = $region104
        $region103: #{tpu_custom_call.1} parent=95 // pred_region
          %s2932 = smul.u32 32, %s34
          %p2933 = scmp.lt.s32.totalorder %s2932, 63
          %s2934 = scalar_select %p2933, %s2932, 63
          %s2935 = smul.addr %s2934, 8
          %s2936 = scalar_lea.vmem %s16, %s2935
        $region104: #{tpu_custom_call.1} parent=95 // pred_fallthru
          _
      $region96: #{tpu_custom_call.1} parent=5 // pred_fallthru
        _
    $region6: #{tpu_custom_call.1} parent=1 // loop_footer
      %s32 = sadd.s32 1, %s28
    $region7: #{tpu_custom_call.1} parent=1 // loop_footer_branch
      %27 = sbr.rel target = $region3
    $region8: #{tpu_custom_call.1} parent=1 // loop_exit
      _
    %2937 = vsyncpa [#allocation4], 1
    %s2938 = scalar_lea.sflag [#allocation4], 1
    %2939 = vsyncpa %s2938, 1

</llo_original>
